<compile_context>
chip_gen: v6e
topology: v6e:2x2x1
jax: 0.10.0
libtpu: 0.0.40
codegen_flags: <defaults>
</compile_context>

<pallas_src>
import functools

import jax
import jax.numpy as jnp
from jax import lax
from jax.experimental import pallas as pl
from jax.experimental.pallas import tpu as pltpu


def autopad(k, p=None):
    if p is None:
        p = k // 2 if isinstance(k, int) else [x // 2 for x in k]
    return p


def _round_up(x, m):
    return (x + m - 1) // m * m


# ----------------------------------------------------------------------------
# Kernel 1: conv as one fused (tm, kk*C1) @ (kk*C1, C2p) matmul + MXU BN stats
# ----------------------------------------------------------------------------
def _conv_stats_kernel(x_ref, xh_ref, m_ref, w_ref, y_ref, ssum_ref, ssq_ref,
                       *, offsets):
    tm = x_ref.shape[0]
    c2 = y_ref.shape[-1]

    xa = x_ref[...].astype(jnp.float32)           # (tm, C1)
    xb = xh_ref[0].astype(jnp.float32)            # (halo, C1)  static halo rows
    xcat = jnp.concatenate([xa, xb], axis=0)      # (tm + halo, C1)

    # In-VMEM im2col: each tap is a pure row offset of the flattened padded
    # image; lane-concat the kk shifted slices into one patch -> single MXU op.
    patch = jnp.concatenate([xcat[off:off + tm, :] for off in offsets], axis=1)
    acc = jnp.dot(patch.astype(jnp.bfloat16), w_ref[...],
                  preferred_element_type=jnp.float32)        # (tm, C2p) f32

    # Store only the real channels (narrow masked store, 16x fewer HBM bytes).
    y_ref[...] = acc[:, :c2].astype(y_ref.dtype)

    # BN statistics on the MXU: row 0 of m is the per-row validity mask
    # (precomputed in the wrapper), rows 1..7 are zero.
    m = m_ref[0]                                             # (8, tm) f32
    ssum_ref[...] = jnp.dot(m, acc, preferred_element_type=jnp.float32)
    ssq_ref[...] = jnp.dot(m, acc * acc, preferred_element_type=jnp.float32)


# ----------------------------------------------------------------------------
# Kernel 2: normalize (precomputed scale/shift) + LeakyReLU
# ----------------------------------------------------------------------------
def _bn_act_kernel(y_ref, scale_ref, shift_ref, o_ref, *, slope):
    z = y_ref[...].astype(jnp.float32) * scale_ref[...] + shift_ref[...]
    o_ref[...] = jnp.where(z >= 0, z, slope * z)


# ----------------------------------------------------------------------------
# Conv module forward
# ----------------------------------------------------------------------------
def conv_forward(x, weight, gamma, beta, *, k, s, p, tm=256, eps=1e-3, slope=0.1):
    """x: (N, C1, H, W) NCHW f32; weight: (C2, C1, k, k) OIHW (PyTorch)."""
    N, C1, H, W = x.shape
    C2 = weight.shape[0]
    Hp, Wp = H + 2 * p, W + 2 * p
    Ho = (H + 2 * p - k) // s + 1
    Wo = (W + 2 * p - k) // s + 1
    kk = k * k
    C2p = _round_up(C2, 128)                      # MXU-side lane padding only
    offsets = tuple(di * Wp + dj for di in range(k) for dj in range(k))
    max_off = offsets[-1]
    halo = _round_up(max(max_off, 1), 8)          # extra rows needed per block

    M = N * Hp * Wp                               # rows at every base position
    nb = int(pl.cdiv(M, tm))
    if nb % 2:
        nb += 1                                   # even parallel steps (v7x 2 TCs)
    Mp = nb * tm

    # kernel-2 row tile: biggest multiple of tm dividing Mp, capped at 512 rows
    rt = tm
    for d in range(nb, 0, -1):
        if nb % d == 0 and d * tm <= max(512, tm):
            rt = d * tm
            break
    nb2 = Mp // rt

    # ---- glue (plain JAX, layout only): padded NHWC rows, bf16 in HBM -------
    x_nhwc = jnp.transpose(x, (0, 2, 3, 1))
    x_pad = jnp.pad(x_nhwc, ((0, 0), (p, p), (p, p), (0, 0)))
    xf = x_pad.reshape(M, C1).astype(jnp.bfloat16)
    xf_ext = jnp.pad(xf, ((0, Mp + halo - M), (0, 0)))       # zero tail + halo
    x_main = xf_ext[:Mp]                                     # (Mp, C1)
    halo_idx = jnp.arange(nb)[:, None] * tm + tm + jnp.arange(halo)[None, :]
    x_halo = jnp.take(xf_ext, halo_idx, axis=0)              # (nb, halo, C1)

    # per-row validity mask, precomputed once (row 0 of an (8, tm) MXU LHS)
    q = jnp.arange(Mp, dtype=jnp.int32)
    in_img = q % (Hp * Wp)
    r = in_img // Wp
    c = in_img % Wp
    valid = ((q < M) & (r % s == 0) & (c % s == 0)
             & (r < Ho * s) & (c < Wo * s)).astype(jnp.float32)
    mask = jnp.zeros((nb, 8, tm), jnp.float32).at[:, 0, :].set(valid.reshape(nb, tm))

    # weights: OIHW -> (kk*C1, C2p) bf16, tap-major rows matching the patch
    w2 = jnp.transpose(weight, (2, 3, 1, 0)).reshape(kk * C1, C2)
    w2p = jnp.pad(w2, ((0, 0), (0, C2p - C2))).astype(jnp.bfloat16)

    # ---- kernel 1: conv + fused BN stats -------------------------------------
    kern1 = functools.partial(_conv_stats_kernel, offsets=offsets)
    ce1 = pl.CostEstimate(
        flops=2 * Mp * kk * C1 * C2p + 2 * (2 * 8 * Mp * C2p),
        transcendentals=0,
        bytes_accessed=(Mp * C1 * 2 + nb * halo * C1 * 2 + nb * 8 * tm * 4
                        + kk * C1 * C2p * 2 + Mp * C2 * 2 + 2 * nb * 8 * C2p * 4))
    y, ssum, ssq = pl.pallas_call(
        kern1,
        out_shape=(jax.ShapeDtypeStruct((Mp, C2), jnp.bfloat16),
                   jax.ShapeDtypeStruct((nb * 8, C2p), jnp.float32),
                   jax.ShapeDtypeStruct((nb * 8, C2p), jnp.float32)),
        grid=(nb,),
        in_specs=[pl.BlockSpec((tm, C1), lambda i: (i, 0)),
                  pl.BlockSpec((1, halo, C1), lambda i: (i, 0, 0)),
                  pl.BlockSpec((1, 8, tm), lambda i: (i, 0, 0)),
                  pl.BlockSpec((kk * C1, C2p), lambda i: (0, 0))],
        out_specs=(pl.BlockSpec((tm, C2), lambda i: (i, 0)),
                   pl.BlockSpec((8, C2p), lambda i: (i, 0)),
                   pl.BlockSpec((8, C2p), lambda i: (i, 0))),
        compiler_params=pltpu.CompilerParams(dimension_semantics=("parallel",)),
        cost_estimate=ce1,
    )(x_main, x_halo, mask, w2p)

    # ---- tiny per-channel reduction -> scale/shift (plain JAX) --------------
    count = jnp.float32(N * Ho * Wo)
    mean = jnp.sum(ssum, axis=0)[:C2] / count
    var = jnp.maximum(jnp.sum(ssq, axis=0)[:C2] / count - mean * mean, 0.0)
    # TODO(synk): use a shifted / Welford-style accumulation for production-scale
    # activations where E[x^2]-E[x]^2 cancellation could bite.
    scale_v = gamma.astype(jnp.float32) * lax.rsqrt(var + eps)
    shift_v = beta.astype(jnp.float32) - mean * scale_v
    scale = scale_v.reshape(1, C2)
    shift = shift_v.reshape(1, C2)

    # ---- kernel 2: normalize + LeakyReLU (large row tiles, real-C2 width) ---
    ce2 = pl.CostEstimate(
        flops=4 * Mp * C2, transcendentals=0,
        bytes_accessed=Mp * C2 * 2 + Mp * C2 * 4 + 2 * C2 * 4)
    z_flat = pl.pallas_call(
        functools.partial(_bn_act_kernel, slope=slope),
        out_shape=jax.ShapeDtypeStruct((Mp, C2), jnp.float32),
        grid=(nb2,),
        in_specs=[pl.BlockSpec((rt, C2), lambda i: (i, 0)),
                  pl.BlockSpec((1, C2), lambda i: (0, 0)),
                  pl.BlockSpec((1, C2), lambda i: (0, 0))],
        out_specs=pl.BlockSpec((rt, C2), lambda i: (i, 0)),
        compiler_params=pltpu.CompilerParams(dimension_semantics=("parallel",)),
        cost_estimate=ce2,
    )(y, scale, shift)

    # ---- final glue: only the small C2-wide tensor is touched here ----------
    # TODO(synk): emit NCHW directly from kernel 2 with an (n, ho)-blocked grid
    # to remove this last (small) valid-row slice + transpose pass.
    z = z_flat[:M].reshape(N, Hp, Wp, C2)
    z = z[:, :(Ho - 1) * s + 1:s, :(Wo - 1) * s + 1:s, :]
    return jnp.transpose(z, (0, 3, 1, 2))


# ----------------------------------------------------------------------------
# reference (pure JAX, f32)
# ----------------------------------------------------------------------------
def conv_forward_ref(x, weight, gamma, beta, *, k, s, p):
    y = lax.conv_general_dilated(
        x.astype(jnp.float32), weight.astype(jnp.float32),
        window_strides=(s, s), padding=[(p, p), (p, p)],
        dimension_numbers=("NCHW", "OIHW", "NCHW"))
    mean = y.mean(axis=(0, 2, 3), keepdims=True)
    var = jnp.mean(jnp.square(y - mean), axis=(0, 2, 3), keepdims=True)
    z = (y - mean) * lax.rsqrt(var + 1e-3)
    z = z * gamma[None, :, None, None] + beta[None, :, None, None]
    return jnp.where(z >= 0, z, 0.1 * z)


# ------------------------------ main -----------------------------------------
if __name__ == "__main__":
    # Conv(c1=4, c2=8, k=3, s=1) -> autopad -> p=1
    N, C1, C2, H, W = 2, 4, 8, 16, 16
    k, s = 3, 1
    p = autopad(k, None)

    key = jax.random.PRNGKey(0)
    kx, kw, kg, kb = jax.random.split(key, 4)
    x = jax.random.normal(kx, (N, C1, H, W), dtype=jnp.float32)
    weight = jax.random.normal(kw, (C2, C1, k, k), dtype=jnp.float32) * 0.1
    gamma = 1.0 + 0.1 * jax.random.normal(kg, (C2,), dtype=jnp.float32)
    beta = 0.1 * jax.random.normal(kb, (C2,), dtype=jnp.float32)

    out = conv_forward(x, weight, gamma, beta, k=k, s=s, p=p)
    out = jax.block_until_ready(out)

    ref = conv_forward_ref(x, weight, gamma, beta, k=k, s=s, p=p)
    assert out.shape == (N, C2, H, W), out.shape
    # bf16 MXU operands + bf16 conv intermediate -> compare at bf16 tolerance
    err = float(jnp.abs(out - ref).max())
    assert jnp.allclose(out, ref, atol=5e-2, rtol=5e-2), err

    print("KERNEL_OK")
</pallas_src>

<mosaic_0001>
module attributes {stable_mosaic.version = 11 : i64} {
  func.func @_conv_stats_kernel(%arg0: i32, %arg1: memref<256x4xbf16, #tpu.memory_space<vmem>>, %arg2: memref<1x40x4xbf16, #tpu.memory_space<vmem>>, %arg3: memref<1x8x256xf32, #tpu.memory_space<vmem>>, %arg4: memref<36x128xbf16, #tpu.memory_space<vmem>>, %arg5: memref<256x8xbf16, #tpu.memory_space<vmem>>, %arg6: memref<8x128xf32, #tpu.memory_space<vmem>>, %arg7: memref<8x128xf32, #tpu.memory_space<vmem>>) attributes {dimension_semantics = [#tpu.dimension_semantics<parallel>], iteration_bounds = array<i64: 4>, scalar_prefetch = 0 : i64, scratch_operands = 0 : i64, tpu.core_type = #tpu.core_type<tc>, window_params = [{transform_indices = @transform_0, window_bounds = array<i64: 256, 4>}, {transform_indices = @transform_1, window_bounds = array<i64: 1, 40, 4>}, {transform_indices = @transform_2, window_bounds = array<i64: 1, 8, 256>}, {pipeline_mode = #tpu.pipeline_mode<synchronous>, transform_indices = @transform_3, window_bounds = array<i64: 36, 128>}, {transform_indices = @transform_4, window_bounds = array<i64: 256, 8>}, {transform_indices = @transform_5, window_bounds = array<i64: 8, 128>}, {transform_indices = @transform_6, window_bounds = array<i64: 8, 128>}]} {
    %c0 = arith.constant 0 : index
    %c0_0 = arith.constant 0 : index
    %0 = vector.load %arg1[%c0, %c0_0] : memref<256x4xbf16, #tpu.memory_space<vmem>>, vector<256x4xbf16>
    %1 = arith.extf %0 : vector<256x4xbf16> to vector<256x4xf32>
    %c0_1 = arith.constant 0 : index
    %c0_2 = arith.constant 0 : index
    %c0_3 = arith.constant 0 : index
    %2 = vector.load %arg2[%c0_1, %c0_2, %c0_3] : memref<1x40x4xbf16, #tpu.memory_space<vmem>>, vector<1x40x4xbf16>
    %3 = vector.shape_cast %2 : vector<1x40x4xbf16> to vector<40x4xbf16>
    %4 = arith.extf %3 : vector<40x4xbf16> to vector<40x4xf32>
    %5 = tpu.concatenate %1, %4 in 0 : vector<256x4xf32>, vector<40x4xf32> -> vector<296x4xf32>
    %6 = vector.extract_strided_slice %5 {offsets = [0, 0], sizes = [256, 4], strides = [1, 1]} : vector<296x4xf32> to vector<256x4xf32>
    %7 = vector.extract_strided_slice %5 {offsets = [1, 0], sizes = [256, 4], strides = [1, 1]} : vector<296x4xf32> to vector<256x4xf32>
    %8 = vector.extract_strided_slice %5 {offsets = [2, 0], sizes = [256, 4], strides = [1, 1]} : vector<296x4xf32> to vector<256x4xf32>
    %9 = vector.extract_strided_slice %5 {offsets = [18, 0], sizes = [256, 4], strides = [1, 1]} : vector<296x4xf32> to vector<256x4xf32>
    %10 = vector.extract_strided_slice %5 {offsets = [19, 0], sizes = [256, 4], strides = [1, 1]} : vector<296x4xf32> to vector<256x4xf32>
    %11 = vector.extract_strided_slice %5 {offsets = [20, 0], sizes = [256, 4], strides = [1, 1]} : vector<296x4xf32> to vector<256x4xf32>
    %12 = vector.extract_strided_slice %5 {offsets = [36, 0], sizes = [256, 4], strides = [1, 1]} : vector<296x4xf32> to vector<256x4xf32>
    %13 = vector.extract_strided_slice %5 {offsets = [37, 0], sizes = [256, 4], strides = [1, 1]} : vector<296x4xf32> to vector<256x4xf32>
    %14 = vector.extract_strided_slice %5 {offsets = [38, 0], sizes = [256, 4], strides = [1, 1]} : vector<296x4xf32> to vector<256x4xf32>
    %15 = tpu.concatenate %6, %7, %8, %9, %10, %11, %12, %13, %14 in 1 : vector<256x4xf32>, vector<256x4xf32>, vector<256x4xf32>, vector<256x4xf32>, vector<256x4xf32>, vector<256x4xf32>, vector<256x4xf32>, vector<256x4xf32>, vector<256x4xf32> -> vector<256x36xf32>
    %16 = arith.truncf %15 : vector<256x36xf32> to vector<256x36xbf16>
    %c0_4 = arith.constant 0 : index
    %c0_5 = arith.constant 0 : index
    %17 = vector.load %arg4[%c0_4, %c0_5] : memref<36x128xbf16, #tpu.memory_space<vmem>>, vector<36x128xbf16>
    %cst = arith.constant dense<0.000000e+00> : vector<256x128xf32>
    %18 = tpu.matmul %16, %17, %cst {dimension_numbers = #tpu.dot_dimension_numbers<[1], [0], [0], [1], [0, 0, 1, 1], [], []>} : vector<256x36xbf16>, vector<36x128xbf16>, vector<256x128xf32> -> vector<256x128xf32>
    %19 = vector.extract_strided_slice %18 {offsets = [0, 0], sizes = [256, 8], strides = [1, 1]} : vector<256x128xf32> to vector<256x8xf32>
    %20 = arith.truncf %19 : vector<256x8xf32> to vector<256x8xbf16>
    %c0_6 = arith.constant 0 : index
    %c0_7 = arith.constant 0 : index
    %21 = vector.load %arg5[%c0_6, %c0_7] : memref<256x8xbf16, #tpu.memory_space<vmem>>, vector<256x8xbf16>
    tpu.vector_store %arg5[%c0_6, %c0_7], %20 {strides = array<i32>} : memref<256x8xbf16, #tpu.memory_space<vmem>>, vector<256x8xbf16>,
    %c0_8 = arith.constant 0 : index
    %c0_9 = arith.constant 0 : index
    %c0_10 = arith.constant 0 : index
    %22 = vector.load %arg3[%c0_8, %c0_9, %c0_10] : memref<1x8x256xf32, #tpu.memory_space<vmem>>, vector<1x8x256xf32>
    %23 = vector.shape_cast %22 : vector<1x8x256xf32> to vector<8x256xf32>
    %cst_11 = arith.constant dense<0.000000e+00> : vector<8x128xf32>
    %24 = tpu.matmul %23, %18, %cst_11 {dimension_numbers = #tpu.dot_dimension_numbers<[1], [0], [0], [1], [0, 0, 1, 1], [], []>} : vector<8x256xf32>, vector<256x128xf32>, vector<8x128xf32> -> vector<8x128xf32>
    %c0_12 = arith.constant 0 : index
    %c0_13 = arith.constant 0 : index
    %25 = vector.load %arg6[%c0_12, %c0_13] : memref<8x128xf32, #tpu.memory_space<vmem>>, vector<8x128xf32>
    tpu.vector_store %arg6[%c0_12, %c0_13], %24 {strides = array<i32>} : memref<8x128xf32, #tpu.memory_space<vmem>>, vector<8x128xf32>,
    %26 = arith.mulf %18, %18 : vector<256x128xf32>
    %cst_14 = arith.constant dense<0.000000e+00> : vector<8x128xf32>
    %27 = tpu.matmul %23, %26, %cst_14 {dimension_numbers = #tpu.dot_dimension_numbers<[1], [0], [0], [1], [0, 0, 1, 1], [], []>} : vector<8x256xf32>, vector<256x128xf32>, vector<8x128xf32> -> vector<8x128xf32>
    %c0_15 = arith.constant 0 : index
    %c0_16 = arith.constant 0 : index
    %28 = vector.load %arg7[%c0_15, %c0_16] : memref<8x128xf32, #tpu.memory_space<vmem>>, vector<8x128xf32>
    tpu.vector_store %arg7[%c0_15, %c0_16], %27 {strides = array<i32>} : memref<8x128xf32, #tpu.memory_space<vmem>>, vector<8x128xf32>,
    return
  }
  func.func @transform_0(%arg0: i32) -> (i32, i32) {
    %c0_i32 = arith.constant 0 : i32
    %c0_i32_0 = arith.constant 0 : i32
    return %arg0, %c0_i32 : i32, i32
  }
  func.func @transform_1(%arg0: i32) -> (i32, i32, i32) {
    %c0_i32 = arith.constant 0 : i32
    %c0_i32_0 = arith.constant 0 : i32
    %c0_i32_1 = arith.constant 0 : i32
    return %arg0, %c0_i32, %c0_i32_0 : i32, i32, i32
  }
  func.func @transform_2(%arg0: i32) -> (i32, i32, i32) {
    %c0_i32 = arith.constant 0 : i32
    %c0_i32_0 = arith.constant 0 : i32
    %c0_i32_1 = arith.constant 0 : i32
    return %arg0, %c0_i32, %c0_i32_0 : i32, i32, i32
  }
  func.func @transform_3(%arg0: i32) -> (i32, i32) {
    %c0_i32 = arith.constant 0 : i32
    %c0_i32_0 = arith.constant 0 : i32
    %c0_i32_1 = arith.constant 0 : i32
    return %c0_i32, %c0_i32_0 : i32, i32
  }
  func.func @transform_4(%arg0: i32) -> (i32, i32) {
    %c0_i32 = arith.constant 0 : i32
    %c0_i32_0 = arith.constant 0 : i32
    return %arg0, %c0_i32 : i32, i32
  }
  func.func @transform_5(%arg0: i32) -> (i32, i32) {
    %c0_i32 = arith.constant 0 : i32
    %c0_i32_0 = arith.constant 0 : i32
    return %arg0, %c0_i32 : i32, i32
  }
  func.func @transform_6(%arg0: i32) -> (i32, i32) {
    %c0_i32 = arith.constant 0 : i32
    %c0_i32_0 = arith.constant 0 : i32
    return %arg0, %c0_i32 : i32, i32
  }
}

</mosaic_0001>

<llo_original>
// kernel: tpu_custom_call.1
$region0: #{tpu_custom_call.1}
  #allocation0 [shape = 'u32[]', space=smem, size = 0x4, offset = 0x4, fixed_abs, tag = 'smem constant byte address 0x4 - core index']
  #allocation1 [shape = 'u32[144,128]{1,0:T(1,128)}', space=vmem, size = 0x12000, scoped, tag = 'internal scratch']
  %s0 = inlined_call_operand.vmem [shape: bf16[1024,4], index: 0, kind: input, shape index: {}]
  %s1 = inlined_call_operand.vmem [shape: bf16[4,40,4], index: 1, kind: input, shape index: {}]
  %s2 = inlined_call_operand.vmem [shape: f32[4,8,256], index: 2, kind: input, shape index: {}]
  %s3 = inlined_call_operand.vmem [shape: bf16[36,128], index: 3, kind: input, shape index: {}]
  %s4 = inlined_call_operand.vmem [shape: bf16[1024,8], index: 4, kind: output, shape index: {0}]
  %s5 = inlined_call_operand.hbm [shape: f32[32,128], index: 5, kind: output, shape index: {1}]
  %s6 = inlined_call_operand.hbm [shape: f32[32,128], index: 6, kind: output, shape index: {2}]
  %7 = xla_tuple %s4, %s5, %s6
  %s8 = sld [smem:[#allocation0]]
  $region65: #{tpu_custom_call.1} parent=0
    _
  %s10 = ssub.s32 1, %s8
  %s11 = scalar_select 0, %s10, %s8
  $region1: #{tpu_custom_call.1} parent=0
    #allocation2 [shape = 'u8[8192]{0}', space=vmem, size = 0x2000, scoped, tag = 'output window, operand 1']
    #allocation3 [shape = 's32[2]{0}', space=sflag, size = 0x8, scoped, tag = 'scoped memory for tpu_custom_call.1']
    #allocation4 [shape = 'u8[8192]{0}', space=vmem, size = 0x2000, scoped, tag = 'output window, operand 2']
    #allocation5 [shape = 's32[2]{0}', space=sflag, size = 0x8, scoped, tag = 'scoped memory for tpu_custom_call.1']
    %12 = vsyncpa [#allocation3], 0
    %s13 = scalar_lea.sflag [#allocation3], 1
    %14 = vsyncpa %s13, 0
    %15 = vsyncpa [#allocation5], 0
    %s16 = scalar_lea.sflag [#allocation5], 1
    %17 = vsyncpa %s16, 0
    loop: start=0, step=1, limit=6
    $region2: #{tpu_custom_call.1} parent=1 // loop_pre_header
      _
    $region3: #{tpu_custom_call.1} parent=1 // loop_header
      %s19 = sphi 0, %s23
      %p20 = scmp.ge.s32.totalorder %s19, 6
      %s29 = sphi 0, %s31
      %s32 = sphi 0, %s29
      %s33 = sphi 0, %s32
      %s49 = sphi 0, %s33
      %s55 = sphi 0, %s57
      %s58 = sphi 0, %s55
      %s59 = sphi 0, %s58
      %s75 = sphi 0, %s59
      %s81 = sphi 0, %s83
      %s84 = sphi 0, %s81
      %s85 = sphi 0, %s84
      %s101 = sphi 0, %s85
      %s105 = sphi 0, %s105
      %s107 = sphi 0, %s105
      %s108 = sphi 0, %s107
      %s122 = sphi 0, %s108
      %s128 = sphi 0, %s130
      %s131 = sphi 0, %s128
      %s132 = sphi 0, %s131
      %s148 = sphi 0, %s132
      %s154 = sphi 0, %s156
      %s157 = sphi 0, %s154
      %s158 = sphi 0, %s157
      %s174 = sphi 0, %s158
      %s180 = sphi 0, %s182
      %s183 = sphi 0, %s180
      %s184 = sphi 0, %s183
      %s200 = sphi 0, %s184
    $region4: #{tpu_custom_call.1} parent=1 // loop_header_branch
      %22 = sbr.rel (%p20) target = $region8
    $region5: #{tpu_custom_call.1} parent=1 // loop_body
      %s24 = ssub.s32 %s19, 1
      %s25 = ssub.s32 %s19, 2
      %s26 = sadd.s32 %s19, 1
      %s27 = ssub.s32 %s19, %s26
      %p28 = scmp.eq.s32.totalorder %s27, 0
      %s30 = sadd.s32 %s29, 1
      %s31 = scalar_select %p28, %s29, %s30
      %p34 = pneg %p28
      %p35 = scmp.eq.s32.totalorder %s19, 3
      %p36 = por %p34, %p35
      %p37 = scmp.ne.s32.totalorder %s29, %s32
      %p38 = scmp.eq.s32.totalorder %s19, 0
      %p39 = por %p37, %p38
      %p40 = scmp.ne.s32.totalorder %s29, %s32
      %p41 = scmp.eq.s32.totalorder %s24, 3
      %p42 = por %p40, %p41
      %p43 = scmp.ne.s32.totalorder %s32, %s33
      %p44 = scmp.eq.s32.totalorder %s24, 0
      %p45 = por %p43, %p44
      %p46 = scmp.ne.s32.totalorder %s32, %s33
      %p47 = scmp.eq.s32.totalorder %s25, 3
      %p48 = por %p46, %p47
      %p50 = scmp.ne.s32.totalorder %s33, %s49
      %p51 = scmp.eq.s32.totalorder %s25, 0
      %p52 = por %p50, %p51
      %s53 = ssub.s32 %s19, %s26
      %p54 = scmp.eq.s32.totalorder %s53, 0
      %s56 = sadd.s32 %s55, 1
      %s57 = scalar_select %p54, %s55, %s56
      %p60 = pneg %p54
      %p61 = scmp.eq.s32.totalorder %s19, 3
      %p62 = por %p60, %p61
      %p63 = scmp.ne.s32.totalorder %s55, %s58
      %p64 = scmp.eq.s32.totalorder %s19, 0
      %p65 = por %p63, %p64
      %p66 = scmp.ne.s32.totalorder %s55, %s58
      %p67 = scmp.eq.s32.totalorder %s24, 3
      %p68 = por %p66, %p67
      %p69 = scmp.ne.s32.totalorder %s58, %s59
      %p70 = scmp.eq.s32.totalorder %s24, 0
      %p71 = por %p69, %p70
      %p72 = scmp.ne.s32.totalorder %s58, %s59
      %p73 = scmp.eq.s32.totalorder %s25, 3
      %p74 = por %p72, %p73
      %p76 = scmp.ne.s32.totalorder %s59, %s75
      %p77 = scmp.eq.s32.totalorder %s25, 0
      %p78 = por %p76, %p77
      %s79 = ssub.s32 %s19, %s26
      %p80 = scmp.eq.s32.totalorder %s79, 0
      %s82 = sadd.s32 %s81, 1
      %s83 = scalar_select %p80, %s81, %s82
      %p86 = pneg %p80
      %p87 = scmp.eq.s32.totalorder %s19, 3
      %p88 = por %p86, %p87
      %p89 = scmp.ne.s32.totalorder %s81, %s84
      %p90 = scmp.eq.s32.totalorder %s19, 0
      %p91 = por %p89, %p90
      %p92 = scmp.ne.s32.totalorder %s81, %s84
      %p93 = scmp.eq.s32.totalorder %s24, 3
      %p94 = por %p92, %p93
      %p95 = scmp.ne.s32.totalorder %s84, %s85
      %p96 = scmp.eq.s32.totalorder %s24, 0
      %p97 = por %p95, %p96
      %p98 = scmp.ne.s32.totalorder %s84, %s85
      %p99 = scmp.eq.s32.totalorder %s25, 3
      %p100 = por %p98, %p99
      %p102 = scmp.ne.s32.totalorder %s85, %s101
      %p103 = scmp.eq.s32.totalorder %s25, 0
      %p104 = por %p102, %p103
      %s106 = sadd.s32 %s105, 1
      %p109 = scmp.eq.s32.totalorder %s19, 3
      %p110 = scmp.ne.s32.totalorder %s105, %s107
      %p111 = scmp.eq.s32.totalorder %s19, 0
      %p112 = por %p110, %p111
      %p113 = scmp.ne.s32.totalorder %s105, %s107
      %p114 = scmp.eq.s32.totalorder %s24, 3
      %p115 = por %p113, %p114
      %p116 = scmp.ne.s32.totalorder %s107, %s108
      %p117 = scmp.eq.s32.totalorder %s24, 0
      %p118 = por %p116, %p117
      %p119 = scmp.ne.s32.totalorder %s107, %s108
      %p120 = scmp.eq.s32.totalorder %s25, 3
      %p121 = por %p119, %p120
      %p123 = scmp.ne.s32.totalorder %s108, %s122
      %p124 = scmp.eq.s32.totalorder %s25, 0
      %p125 = por %p123, %p124
      %s126 = ssub.s32 %s19, %s26
      %p127 = scmp.eq.s32.totalorder %s126, 0
      %s129 = sadd.s32 %s128, 1
      %s130 = scalar_select %p127, %s128, %s129
      %p133 = pneg %p127
      %p134 = scmp.eq.s32.totalorder %s19, 3
      %p135 = por %p133, %p134
      %p136 = scmp.ne.s32.totalorder %s128, %s131
      %p137 = scmp.eq.s32.totalorder %s19, 0
      %p138 = por %p136, %p137
      %p139 = scmp.ne.s32.totalorder %s128, %s131
      %p140 = scmp.eq.s32.totalorder %s24, 3
      %p141 = por %p139, %p140
      %p142 = scmp.ne.s32.totalorder %s131, %s132
      %p143 = scmp.eq.s32.totalorder %s24, 0
      %p144 = por %p142, %p143
      %p145 = scmp.ne.s32.totalorder %s131, %s132
      %p146 = scmp.eq.s32.totalorder %s25, 3
      %p147 = por %p145, %p146
      %p149 = scmp.ne.s32.totalorder %s132, %s148
      %p150 = scmp.eq.s32.totalorder %s25, 0
      %p151 = por %p149, %p150
      %s152 = ssub.s32 %s19, %s26
      %p153 = scmp.eq.s32.totalorder %s152, 0
      %s155 = sadd.s32 %s154, 1
      %s156 = scalar_select %p153, %s154, %s155
      %p159 = pneg %p153
      %p160 = scmp.eq.s32.totalorder %s19, 3
      %p161 = por %p159, %p160
      %p162 = scmp.ne.s32.totalorder %s154, %s157
      %p163 = scmp.eq.s32.totalorder %s19, 0
      %p164 = por %p162, %p163
      %p165 = scmp.ne.s32.totalorder %s154, %s157
      %p166 = scmp.eq.s32.totalorder %s24, 3
      %p167 = por %p165, %p166
      %p168 = scmp.ne.s32.totalorder %s157, %s158
      %p169 = scmp.eq.s32.totalorder %s24, 0
      %p170 = por %p168, %p169
      %p171 = scmp.ne.s32.totalorder %s157, %s158
      %p172 = scmp.eq.s32.totalorder %s25, 3
      %p173 = por %p171, %p172
      %p175 = scmp.ne.s32.totalorder %s158, %s174
      %p176 = scmp.eq.s32.totalorder %s25, 0
      %p177 = por %p175, %p176
      %s178 = ssub.s32 %s19, %s26
      %p179 = scmp.eq.s32.totalorder %s178, 0
      %s181 = sadd.s32 %s180, 1
      %s182 = scalar_select %p179, %s180, %s181
      %p185 = pneg %p179
      %p186 = scmp.eq.s32.totalorder %s19, 3
      %p187 = por %p185, %p186
      %p188 = scmp.ne.s32.totalorder %s180, %s183
      %p189 = scmp.eq.s32.totalorder %s19, 0
      %p190 = por %p188, %p189
      %p191 = scmp.ne.s32.totalorder %s180, %s183
      %p192 = scmp.eq.s32.totalorder %s24, 3
      %p193 = por %p191, %p192
      %p194 = scmp.ne.s32.totalorder %s183, %s184
      %p195 = scmp.eq.s32.totalorder %s24, 0
      %p196 = por %p194, %p195
      %p197 = scmp.ne.s32.totalorder %s183, %s184
      %p198 = scmp.eq.s32.totalorder %s25, 3
      %p199 = por %p197, %p198
      %p201 = scmp.ne.s32.totalorder %s184, %s200
      %p202 = scmp.eq.s32.totalorder %s25, 0
      %p203 = por %p201, %p202
      %p204 = scmp.le.s32.totalorder 1, %s19
      %p205 = scmp.lt.s32.totalorder %s19, 5
      %p206 = pnand %p204, %p205
      %p207 = pneg %p206
      // Predicated region
      $region9: #{tpu_custom_call.1} parent=5 // pred_check
        _
      $region10: #{tpu_custom_call.1} parent=5 // pred_check_branch
        %209 = sbr.rel (%p206) target = $region12
      $region11: #{tpu_custom_call.1} parent=5 // pred_region
        %s210 = ssub.s32 %s19, 1
        // Predicated region
        $region13: #{tpu_custom_call.1} parent=11 // pred_check
          %p211 = pneg %p118
        $region14: #{tpu_custom_call.1} parent=11 // pred_check_branch
          %213 = sbr.rel (%p211) target = $region16
        $region15: #{tpu_custom_call.1} parent=11 // pred_region
          _
        $region16: #{tpu_custom_call.1} parent=11 // pred_fallthru
          _
      $region12: #{tpu_custom_call.1} parent=5 // pred_fallthru
        _
      %p214 = scmp.lt.s32.totalorder %s19, 4
      // Predicated region
      $region17: #{tpu_custom_call.1} parent=5 // pred_check
        %p215 = pneg %p214
      $region18: #{tpu_custom_call.1} parent=5 // pred_check_branch
        %217 = sbr.rel (%p215) target = $region20
      $region19: #{tpu_custom_call.1} parent=5 // pred_region
        // Predicated region
        $region21: #{tpu_custom_call.1} parent=19 // pred_check
          %p218 = pneg %p39
        $region22: #{tpu_custom_call.1} parent=19 // pred_check_branch
          %220 = sbr.rel (%p218) target = $region24
        $region23: #{tpu_custom_call.1} parent=19 // pred_region
          %s221 = smul.u32 32, %s19
          %p222 = scmp.lt.s32.totalorder %s221, 127
          %s223 = scalar_select %p222, %s221, 127
          %s224 = smul.addr %s223, 4
          %s225 = scalar_lea.vmem %s0, %s224
          %s226 = smul.u32 32, %s19
        $region24: #{tpu_custom_call.1} parent=19 // pred_fallthru
          _
        // Predicated region
        $region25: #{tpu_custom_call.1} parent=19 // pred_check
          %p227 = pneg %p65
        $region26: #{tpu_custom_call.1} parent=19 // pred_check_branch
          %229 = sbr.rel (%p227) target = $region28
        $region27: #{tpu_custom_call.1} parent=19 // pred_region
          %p230 = scmp.lt.s32.totalorder %s19, 3
          %s231 = scalar_select %p230, %s19, 3
          %s232 = smul.addr %s231, 5
          %s233 = smul.addr %s232, 4
          %s234 = scalar_lea.vmem %s1, %s233
        $region28: #{tpu_custom_call.1} parent=19 // pred_fallthru
          _
        // Predicated region
        $region29: #{tpu_custom_call.1} parent=19 // pred_check
          %p235 = pneg %p91
        $region30: #{tpu_custom_call.1} parent=19 // pred_check_branch
          %237 = sbr.rel (%p235) target = $region32
        $region31: #{tpu_custom_call.1} parent=19 // pred_region
          %p238 = scmp.lt.s32.totalorder %s19, 3
          %s239 = scalar_select %p238, %s19, 3
          %s240 = smul.addr %s239, 2
          %s241 = smul.addr %s240, 8
          %s242 = scalar_lea.vmem %s2, %s241
        $region32: #{tpu_custom_call.1} parent=19 // pred_fallthru
          _
      $region20: #{tpu_custom_call.1} parent=5 // pred_fallthru
        _
      %p243 = scmp.le.s32.totalorder 1, %s19
      %p244 = scmp.lt.s32.totalorder %s19, 5
      %p245 = pnand %p243, %p244
      %p246 = pneg %p245
      // Predicated region
      $region33: #{tpu_custom_call.1} parent=5 // pred_check
        _
      $region34: #{tpu_custom_call.1} parent=5 // pred_check_branch
        %248 = sbr.rel (%p245) target = $region36
      $region35: #{tpu_custom_call.1} parent=5 // pred_region
        %s249 = ssub.s32 %s19, 1
        %s250 = smul.u32 32, %s24
        %p251 = scmp.lt.s32.totalorder %s250, 127
        %s252 = scalar_select %p251, %s250, 127
        %s253 = smul.addr %s252, 4
        %s254 = scalar_lea.vmem %s0, %s253
        %p255 = pneg %p45
        %p256 = pneg %p42
        %p257 = scmp.lt.s32.totalorder %s24, 3
        %s258 = scalar_select %p257, %s24, 3
        %s259 = smul.addr %s258, 5
        %s260 = smul.addr %s259, 4
        %s261 = scalar_lea.vmem %s1, %s260
        %p262 = pneg %p71
        %p263 = pneg %p68
        %p264 = scmp.lt.s32.totalorder %s24, 3
        %s265 = scalar_select %p264, %s24, 3
        %s266 = smul.addr %s265, 2
        %s267 = smul.addr %s266, 8
        %s268 = scalar_lea.vmem %s2, %s267
        %p269 = pneg %p97
        %p270 = pneg %p94
        %p271 = pneg %p118
        %p272 = pneg %p115
        %p273 = pneg %p144
        %p274 = pneg %p141
        %s275 = smul.u32 32, %s24
        %p276 = scmp.lt.s32.totalorder %s275, 127
        %s277 = scalar_select %p276, %s275, 127
        %s278 = smul.addr %s277, 4
        %s279 = scalar_lea.vmem %s4, %s278
        %p280 = pneg %p170
        %p281 = pneg %p167
        %s282 = sand.u32 %s157, 1
        %s283 = scalar_lea.sflag [#allocation3], %s282
        %s284 = sand.u32 %s157, 1
        %s285 = smul.addr %s284, 8
        %s286 = scalar_lea.vmem [#allocation2], %s285
        %p287 = pneg %p196
        %p288 = pneg %p193
        %s289 = sand.u32 %s183, 1
        %s290 = scalar_lea.sflag [#allocation5], %s289
        %s291 = sand.u32 %s183, 1
        %s292 = smul.addr %s291, 8
        %s293 = scalar_lea.vmem [#allocation4], %s292
        %s294 = smul.u32 32, %s24
        %p295 = scmp.lt.s32.totalorder %s294, 127
        %s296 = scalar_select %p295, %s294, 127
        %s297 = smul.addr %s296, 4
        %s298 = scalar_lea.vmem %s0, %s297
        %s299 = smul.u32 32, %s24
        %p300 = scmp.lt.s32.totalorder %s24, 3
        %s301 = scalar_select %p300, %s24, 3
        %s302 = smul.addr %s301, 5
        %s303 = smul.addr %s302, 4
        %s304 = scalar_lea.vmem %s1, %s303
        %p305 = scmp.lt.s32.totalorder %s24, 3
        %s306 = scalar_select %p305, %s24, 3
        %s307 = smul.addr %s306, 2
        %s308 = smul.addr %s307, 8
        %s309 = scalar_lea.vmem %s2, %s308
        %s310 = smul.u32 32, %s24
        %p311 = scmp.lt.s32.totalorder %s310, 127
        %s312 = scalar_select %p311, %s310, 127
        %s313 = smul.addr %s312, 4
        %s314 = scalar_lea.vmem %s4, %s313
        %s315 = smul.u32 32, %s24
        %v317 = vld [vmem:[%s298] sm:$0xf]
        %v318 = vld [vmem:[%s298 + $0x4] sm:$0xf]
        %v319 = vld [vmem:[%s298 + $0x8] sm:$0xf]
        %v320 = vld [vmem:[%s298 + $0xc] sm:$0xf]
        %v321 = vld [vmem:[%s298 + $0x10] sm:$0xf]
        %v322 = vld [vmem:[%s298 + $0x14] sm:$0xf]
        %v323 = vld [vmem:[%s298 + $0x18] sm:$0xf]
        %v324 = vld [vmem:[%s298 + $0x1c] sm:$0xf]
        %v325 = vld [vmem:[%s298 + $0x20] sm:$0xf]
        %v326 = vld [vmem:[%s298 + $0x24] sm:$0xf]
        %v327 = vld [vmem:[%s298 + $0x28] sm:$0xf]
        %v328 = vld [vmem:[%s298 + $0x2c] sm:$0xf]
        %v329 = vld [vmem:[%s298 + $0x30] sm:$0xf]
        %v330 = vld [vmem:[%s298 + $0x34] sm:$0xf]
        %v331 = vld [vmem:[%s298 + $0x38] sm:$0xf]
        %v332 = vld [vmem:[%s298 + $0x3c] sm:$0xf]
        %v333 = vld [vmem:[%s298 + $0x40] sm:$0xf]
        %v334 = vld [vmem:[%s298 + $0x44] sm:$0xf]
        %v335 = vld [vmem:[%s298 + $0x48] sm:$0xf]
        %v336 = vld [vmem:[%s298 + $0x4c] sm:$0xf]
        %v337 = vld [vmem:[%s298 + $0x50] sm:$0xf]
        %v338 = vld [vmem:[%s298 + $0x54] sm:$0xf]
        %v339 = vld [vmem:[%s298 + $0x58] sm:$0xf]
        %v340 = vld [vmem:[%s298 + $0x5c] sm:$0xf]
        %v341 = vld [vmem:[%s298 + $0x60] sm:$0xf]
        %v342 = vld [vmem:[%s298 + $0x64] sm:$0xf]
        %v343 = vld [vmem:[%s298 + $0x68] sm:$0xf]
        %v344 = vld [vmem:[%s298 + $0x6c] sm:$0xf]
        %v345 = vld [vmem:[%s298 + $0x70] sm:$0xf]
        %v346 = vld [vmem:[%s298 + $0x74] sm:$0xf]
        %v347 = vld [vmem:[%s298 + $0x78] sm:$0xf]
        %v348 = vld [vmem:[%s298 + $0x7c] sm:$0xf]
        %v349 = vunpack.c.l.bf16 %v317
        %v350 = vunpack.c.l.bf16 %v318
        %v351 = vunpack.c.l.bf16 %v319
        %v352 = vunpack.c.l.bf16 %v320
        %v353 = vunpack.c.l.bf16 %v321
        %v354 = vunpack.c.l.bf16 %v322
        %v355 = vunpack.c.l.bf16 %v323
        %v356 = vunpack.c.l.bf16 %v324
        %v357 = vunpack.c.l.bf16 %v325
        %v358 = vunpack.c.l.bf16 %v326
        %v359 = vunpack.c.l.bf16 %v327
        %v360 = vunpack.c.l.bf16 %v328
        %v361 = vunpack.c.l.bf16 %v329
        %v362 = vunpack.c.l.bf16 %v330
        %v363 = vunpack.c.l.bf16 %v331
        %v364 = vunpack.c.l.bf16 %v332
        %v365 = vunpack.c.l.bf16 %v333
        %v366 = vunpack.c.l.bf16 %v334
        %v367 = vunpack.c.l.bf16 %v335
        %v368 = vunpack.c.l.bf16 %v336
        %v369 = vunpack.c.l.bf16 %v337
        %v370 = vunpack.c.l.bf16 %v338
        %v371 = vunpack.c.l.bf16 %v339
        %v372 = vunpack.c.l.bf16 %v340
        %v373 = vunpack.c.l.bf16 %v341
        %v374 = vunpack.c.l.bf16 %v342
        %v375 = vunpack.c.l.bf16 %v343
        %v376 = vunpack.c.l.bf16 %v344
        %v377 = vunpack.c.l.bf16 %v345
        %v378 = vunpack.c.l.bf16 %v346
        %v379 = vunpack.c.l.bf16 %v347
        %v380 = vunpack.c.l.bf16 %v348
        %v381 = vld [vmem:[%s304] sm:$0xf]
        %v382 = vld [vmem:[%s304 + $0x4] sm:$0xf]
        %v383 = vld [vmem:[%s304 + $0x8] sm:$0xf]
        %v384 = vld [vmem:[%s304 + $0xc] sm:$0xf]
        %v385 = vld [vmem:[%s304 + $0x10] sm:$0xf]
        %v386 = vunpack.c.l.bf16 %v381
        %v387 = vunpack.c.l.bf16 %v382
        %v388 = vunpack.c.l.bf16 %v383
        %v389 = vunpack.c.l.bf16 %v384
        %v390 = vunpack.c.l.bf16 %v385
        %vm424 = vcmask 1046528
        %v425 = vrot.slane %v349, 1
        %v426 = vrot.slane %v350, 1
        %v427 = vsel %vm424, %v425, %v426
        %v428 = vrot.slane %v351, 1
        %v429 = vsel %vm424, %v426, %v428
        %v430 = vrot.slane %v352, 1
        %v431 = vsel %vm424, %v428, %v430
        %v432 = vrot.slane %v353, 1
        %v433 = vsel %vm424, %v430, %v432
        %v434 = vrot.slane %v354, 1
        %v435 = vsel %vm424, %v432, %v434
        %v436 = vrot.slane %v355, 1
        %v437 = vsel %vm424, %v434, %v436
        %v438 = vrot.slane %v356, 1
        %v439 = vsel %vm424, %v436, %v438
        %v440 = vrot.slane %v357, 1
        %v441 = vsel %vm424, %v438, %v440
        %v442 = vrot.slane %v358, 1
        %v443 = vsel %vm424, %v440, %v442
        %v444 = vrot.slane %v359, 1
        %v445 = vsel %vm424, %v442, %v444
        %v446 = vrot.slane %v360, 1
        %v447 = vsel %vm424, %v444, %v446
        %v448 = vrot.slane %v361, 1
        %v449 = vsel %vm424, %v446, %v448
        %v450 = vrot.slane %v362, 1
        %v451 = vsel %vm424, %v448, %v450
        %v452 = vrot.slane %v363, 1
        %v453 = vsel %vm424, %v450, %v452
        %v454 = vrot.slane %v364, 1
        %v455 = vsel %vm424, %v452, %v454
        %v456 = vrot.slane %v365, 1
        %v457 = vsel %vm424, %v454, %v456
        %v458 = vrot.slane %v366, 1
        %v459 = vsel %vm424, %v456, %v458
        %v460 = vrot.slane %v367, 1
        %v461 = vsel %vm424, %v458, %v460
        %v462 = vrot.slane %v368, 1
        %v463 = vsel %vm424, %v460, %v462
        %v464 = vrot.slane %v369, 1
        %v465 = vsel %vm424, %v462, %v464
        %v466 = vrot.slane %v370, 1
        %v467 = vsel %vm424, %v464, %v466
        %v468 = vrot.slane %v371, 1
        %v469 = vsel %vm424, %v466, %v468
        %v470 = vrot.slane %v372, 1
        %v471 = vsel %vm424, %v468, %v470
        %v472 = vrot.slane %v373, 1
        %v473 = vsel %vm424, %v470, %v472
        %v474 = vrot.slane %v374, 1
        %v475 = vsel %vm424, %v472, %v474
        %v476 = vrot.slane %v375, 1
        %v477 = vsel %vm424, %v474, %v476
        %v478 = vrot.slane %v376, 1
        %v479 = vsel %vm424, %v476, %v478
        %v480 = vrot.slane %v377, 1
        %v481 = vsel %vm424, %v478, %v480
        %v482 = vrot.slane %v378, 1
        %v483 = vsel %vm424, %v480, %v482
        %v484 = vrot.slane %v379, 1
        %v485 = vsel %vm424, %v482, %v484
        %v486 = vrot.slane %v380, 1
        %v487 = vsel %vm424, %v484, %v486
        %v488 = vrot.slane %v386, 1
        %v489 = vsel %vm424, %v486, %v488
        %490 = vrot.lane.b32.xlu0 %v427, 4
        %v491 = vpop.permute.xlu0 %490
        %492 = vrot.lane.b32.xlu0 %v429, 4
        %v493 = vpop.permute.xlu0 %492
        %494 = vrot.lane.b32.xlu0 %v431, 4
        %v495 = vpop.permute.xlu0 %494
        %496 = vrot.lane.b32.xlu0 %v433, 4
        %v497 = vpop.permute.xlu0 %496
        %498 = vrot.lane.b32.xlu0 %v435, 4
        %v499 = vpop.permute.xlu0 %498
        %500 = vrot.lane.b32.xlu0 %v437, 4
        %v501 = vpop.permute.xlu0 %500
        %502 = vrot.lane.b32.xlu0 %v439, 4
        %v503 = vpop.permute.xlu0 %502
        %504 = vrot.lane.b32.xlu0 %v441, 4
        %v505 = vpop.permute.xlu0 %504
        %506 = vrot.lane.b32.xlu0 %v443, 4
        %v507 = vpop.permute.xlu0 %506
        %508 = vrot.lane.b32.xlu0 %v445, 4
        %v509 = vpop.permute.xlu0 %508
        %510 = vrot.lane.b32.xlu0 %v447, 4
        %v511 = vpop.permute.xlu0 %510
        %512 = vrot.lane.b32.xlu0 %v449, 4
        %v513 = vpop.permute.xlu0 %512
        %514 = vrot.lane.b32.xlu0 %v451, 4
        %v515 = vpop.permute.xlu0 %514
        %516 = vrot.lane.b32.xlu0 %v453, 4
        %v517 = vpop.permute.xlu0 %516
        %518 = vrot.lane.b32.xlu0 %v455, 4
        %v519 = vpop.permute.xlu0 %518
        %520 = vrot.lane.b32.xlu0 %v457, 4
        %v521 = vpop.permute.xlu0 %520
        %522 = vrot.lane.b32.xlu0 %v459, 4
        %v523 = vpop.permute.xlu0 %522
        %524 = vrot.lane.b32.xlu0 %v461, 4
        %v525 = vpop.permute.xlu0 %524
        %526 = vrot.lane.b32.xlu0 %v463, 4
        %v527 = vpop.permute.xlu0 %526
        %528 = vrot.lane.b32.xlu0 %v465, 4
        %v529 = vpop.permute.xlu0 %528
        %530 = vrot.lane.b32.xlu0 %v467, 4
        %v531 = vpop.permute.xlu0 %530
        %532 = vrot.lane.b32.xlu0 %v469, 4
        %v533 = vpop.permute.xlu0 %532
        %534 = vrot.lane.b32.xlu0 %v471, 4
        %v535 = vpop.permute.xlu0 %534
        %536 = vrot.lane.b32.xlu0 %v473, 4
        %v537 = vpop.permute.xlu0 %536
        %538 = vrot.lane.b32.xlu0 %v475, 4
        %v539 = vpop.permute.xlu0 %538
        %540 = vrot.lane.b32.xlu0 %v477, 4
        %v541 = vpop.permute.xlu0 %540
        %542 = vrot.lane.b32.xlu0 %v479, 4
        %v543 = vpop.permute.xlu0 %542
        %544 = vrot.lane.b32.xlu0 %v481, 4
        %v545 = vpop.permute.xlu0 %544
        %546 = vrot.lane.b32.xlu0 %v483, 4
        %v547 = vpop.permute.xlu0 %546
        %548 = vrot.lane.b32.xlu0 %v485, 4
        %v549 = vpop.permute.xlu0 %548
        %550 = vrot.lane.b32.xlu0 %v487, 4
        %v551 = vpop.permute.xlu0 %550
        %552 = vrot.lane.b32.xlu0 %v489, 4
        %v553 = vpop.permute.xlu0 %552
        %vm586 = vcmask 1045504
        %v587 = vrot.slane %v349, 2
        %v588 = vrot.slane %v350, 2
        %v589 = vsel %vm586, %v587, %v588
        %v590 = vrot.slane %v351, 2
        %v591 = vsel %vm586, %v588, %v590
        %v592 = vrot.slane %v352, 2
        %v593 = vsel %vm586, %v590, %v592
        %v594 = vrot.slane %v353, 2
        %v595 = vsel %vm586, %v592, %v594
        %v596 = vrot.slane %v354, 2
        %v597 = vsel %vm586, %v594, %v596
        %v598 = vrot.slane %v355, 2
        %v599 = vsel %vm586, %v596, %v598
        %v600 = vrot.slane %v356, 2
        %v601 = vsel %vm586, %v598, %v600
        %v602 = vrot.slane %v357, 2
        %v603 = vsel %vm586, %v600, %v602
        %v604 = vrot.slane %v358, 2
        %v605 = vsel %vm586, %v602, %v604
        %v606 = vrot.slane %v359, 2
        %v607 = vsel %vm586, %v604, %v606
        %v608 = vrot.slane %v360, 2
        %v609 = vsel %vm586, %v606, %v608
        %v610 = vrot.slane %v361, 2
        %v611 = vsel %vm586, %v608, %v610
        %v612 = vrot.slane %v362, 2
        %v613 = vsel %vm586, %v610, %v612
        %v614 = vrot.slane %v363, 2
        %v615 = vsel %vm586, %v612, %v614
        %v616 = vrot.slane %v364, 2
        %v617 = vsel %vm586, %v614, %v616
        %v618 = vrot.slane %v365, 2
        %v619 = vsel %vm586, %v616, %v618
        %v620 = vrot.slane %v366, 2
        %v621 = vsel %vm586, %v618, %v620
        %v622 = vrot.slane %v367, 2
        %v623 = vsel %vm586, %v620, %v622
        %v624 = vrot.slane %v368, 2
        %v625 = vsel %vm586, %v622, %v624
        %v626 = vrot.slane %v369, 2
        %v627 = vsel %vm586, %v624, %v626
        %v628 = vrot.slane %v370, 2
        %v629 = vsel %vm586, %v626, %v628
        %v630 = vrot.slane %v371, 2
        %v631 = vsel %vm586, %v628, %v630
        %v632 = vrot.slane %v372, 2
        %v633 = vsel %vm586, %v630, %v632
        %v634 = vrot.slane %v373, 2
        %v635 = vsel %vm586, %v632, %v634
        %v636 = vrot.slane %v374, 2
        %v637 = vsel %vm586, %v634, %v636
        %v638 = vrot.slane %v375, 2
        %v639 = vsel %vm586, %v636, %v638
        %v640 = vrot.slane %v376, 2
        %v641 = vsel %vm586, %v638, %v640
        %v642 = vrot.slane %v377, 2
        %v643 = vsel %vm586, %v640, %v642
        %v644 = vrot.slane %v378, 2
        %v645 = vsel %vm586, %v642, %v644
        %v646 = vrot.slane %v379, 2
        %v647 = vsel %vm586, %v644, %v646
        %v648 = vrot.slane %v380, 2
        %v649 = vsel %vm586, %v646, %v648
        %v650 = vrot.slane %v386, 2
        %v651 = vsel %vm586, %v648, %v650
        %652 = vrot.lane.b32.xlu0 %v589, 8
        %v653 = vpop.permute.xlu0 %652
        %654 = vrot.lane.b32.xlu0 %v591, 8
        %v655 = vpop.permute.xlu0 %654
        %656 = vrot.lane.b32.xlu0 %v593, 8
        %v657 = vpop.permute.xlu0 %656
        %658 = vrot.lane.b32.xlu0 %v595, 8
        %v659 = vpop.permute.xlu0 %658
        %660 = vrot.lane.b32.xlu0 %v597, 8
        %v661 = vpop.permute.xlu0 %660
        %662 = vrot.lane.b32.xlu0 %v599, 8
        %v663 = vpop.permute.xlu0 %662
        %664 = vrot.lane.b32.xlu0 %v601, 8
        %v665 = vpop.permute.xlu0 %664
        %666 = vrot.lane.b32.xlu0 %v603, 8
        %v667 = vpop.permute.xlu0 %666
        %668 = vrot.lane.b32.xlu0 %v605, 8
        %v669 = vpop.permute.xlu0 %668
        %670 = vrot.lane.b32.xlu0 %v607, 8
        %v671 = vpop.permute.xlu0 %670
        %672 = vrot.lane.b32.xlu0 %v609, 8
        %v673 = vpop.permute.xlu0 %672
        %674 = vrot.lane.b32.xlu0 %v611, 8
        %v675 = vpop.permute.xlu0 %674
        %676 = vrot.lane.b32.xlu0 %v613, 8
        %v677 = vpop.permute.xlu0 %676
        %678 = vrot.lane.b32.xlu0 %v615, 8
        %v679 = vpop.permute.xlu0 %678
        %680 = vrot.lane.b32.xlu0 %v617, 8
        %v681 = vpop.permute.xlu0 %680
        %682 = vrot.lane.b32.xlu0 %v619, 8
        %v683 = vpop.permute.xlu0 %682
        %684 = vrot.lane.b32.xlu0 %v621, 8
        %v685 = vpop.permute.xlu0 %684
        %686 = vrot.lane.b32.xlu0 %v623, 8
        %v687 = vpop.permute.xlu0 %686
        %688 = vrot.lane.b32.xlu0 %v625, 8
        %v689 = vpop.permute.xlu0 %688
        %690 = vrot.lane.b32.xlu0 %v627, 8
        %v691 = vpop.permute.xlu0 %690
        %692 = vrot.lane.b32.xlu0 %v629, 8
        %v693 = vpop.permute.xlu0 %692
        %694 = vrot.lane.b32.xlu0 %v631, 8
        %v695 = vpop.permute.xlu0 %694
        %696 = vrot.lane.b32.xlu0 %v633, 8
        %v697 = vpop.permute.xlu0 %696
        %698 = vrot.lane.b32.xlu0 %v635, 8
        %v699 = vpop.permute.xlu0 %698
        %700 = vrot.lane.b32.xlu0 %v637, 8
        %v701 = vpop.permute.xlu0 %700
        %702 = vrot.lane.b32.xlu0 %v639, 8
        %v703 = vpop.permute.xlu0 %702
        %704 = vrot.lane.b32.xlu0 %v641, 8
        %v705 = vpop.permute.xlu0 %704
        %706 = vrot.lane.b32.xlu0 %v643, 8
        %v707 = vpop.permute.xlu0 %706
        %708 = vrot.lane.b32.xlu0 %v645, 8
        %v709 = vpop.permute.xlu0 %708
        %710 = vrot.lane.b32.xlu0 %v647, 8
        %v711 = vpop.permute.xlu0 %710
        %712 = vrot.lane.b32.xlu0 %v649, 8
        %v713 = vpop.permute.xlu0 %712
        %714 = vrot.lane.b32.xlu0 %v651, 8
        %v715 = vpop.permute.xlu0 %714
        %v750 = vrot.slane %v387, 2
        %v751 = vsel %vm586, %v650, %v750
        %v752 = vrot.slane %v388, 2
        %v753 = vsel %vm586, %v750, %v752
        %754 = vrot.lane.b32.xlu0 %v593, 12
        %v755 = vpop.permute.xlu0 %754
        %756 = vrot.lane.b32.xlu0 %v595, 12
        %v757 = vpop.permute.xlu0 %756
        %758 = vrot.lane.b32.xlu0 %v597, 12
        %v759 = vpop.permute.xlu0 %758
        %760 = vrot.lane.b32.xlu0 %v599, 12
        %v761 = vpop.permute.xlu0 %760
        %762 = vrot.lane.b32.xlu0 %v601, 12
        %v763 = vpop.permute.xlu0 %762
        %764 = vrot.lane.b32.xlu0 %v603, 12
        %v765 = vpop.permute.xlu0 %764
        %766 = vrot.lane.b32.xlu0 %v605, 12
        %v767 = vpop.permute.xlu0 %766
        %768 = vrot.lane.b32.xlu0 %v607, 12
        %v769 = vpop.permute.xlu0 %768
        %770 = vrot.lane.b32.xlu0 %v609, 12
        %v771 = vpop.permute.xlu0 %770
        %772 = vrot.lane.b32.xlu0 %v611, 12
        %v773 = vpop.permute.xlu0 %772
        %774 = vrot.lane.b32.xlu0 %v613, 12
        %v775 = vpop.permute.xlu0 %774
        %776 = vrot.lane.b32.xlu0 %v615, 12
        %v777 = vpop.permute.xlu0 %776
        %778 = vrot.lane.b32.xlu0 %v617, 12
        %v779 = vpop.permute.xlu0 %778
        %780 = vrot.lane.b32.xlu0 %v619, 12
        %v781 = vpop.permute.xlu0 %780
        %782 = vrot.lane.b32.xlu0 %v621, 12
        %v783 = vpop.permute.xlu0 %782
        %784 = vrot.lane.b32.xlu0 %v623, 12
        %v785 = vpop.permute.xlu0 %784
        %786 = vrot.lane.b32.xlu0 %v625, 12
        %v787 = vpop.permute.xlu0 %786
        %788 = vrot.lane.b32.xlu0 %v627, 12
        %v789 = vpop.permute.xlu0 %788
        %790 = vrot.lane.b32.xlu0 %v629, 12
        %v791 = vpop.permute.xlu0 %790
        %792 = vrot.lane.b32.xlu0 %v631, 12
        %v793 = vpop.permute.xlu0 %792
        %794 = vrot.lane.b32.xlu0 %v633, 12
        %v795 = vpop.permute.xlu0 %794
        %796 = vrot.lane.b32.xlu0 %v635, 12
        %v797 = vpop.permute.xlu0 %796
        %798 = vrot.lane.b32.xlu0 %v637, 12
        %v799 = vpop.permute.xlu0 %798
        %800 = vrot.lane.b32.xlu0 %v639, 12
        %v801 = vpop.permute.xlu0 %800
        %802 = vrot.lane.b32.xlu0 %v641, 12
        %v803 = vpop.permute.xlu0 %802
        %804 = vrot.lane.b32.xlu0 %v643, 12
        %v805 = vpop.permute.xlu0 %804
        %806 = vrot.lane.b32.xlu0 %v645, 12
        %v807 = vpop.permute.xlu0 %806
        %808 = vrot.lane.b32.xlu0 %v647, 12
        %v809 = vpop.permute.xlu0 %808
        %810 = vrot.lane.b32.xlu0 %v649, 12
        %v811 = vpop.permute.xlu0 %810
        %812 = vrot.lane.b32.xlu0 %v651, 12
        %v813 = vpop.permute.xlu0 %812
        %814 = vrot.lane.b32.xlu0 %v751, 12
        %v815 = vpop.permute.xlu0 %814
        %816 = vrot.lane.b32.xlu0 %v753, 12
        %v817 = vpop.permute.xlu0 %816
        %vm850 = vcmask 1044480
        %v851 = vrot.slane %v351, 3
        %v852 = vrot.slane %v352, 3
        %v853 = vsel %vm850, %v851, %v852
        %v854 = vrot.slane %v353, 3
        %v855 = vsel %vm850, %v852, %v854
        %v856 = vrot.slane %v354, 3
        %v857 = vsel %vm850, %v854, %v856
        %v858 = vrot.slane %v355, 3
        %v859 = vsel %vm850, %v856, %v858
        %v860 = vrot.slane %v356, 3
        %v861 = vsel %vm850, %v858, %v860
        %v862 = vrot.slane %v357, 3
        %v863 = vsel %vm850, %v860, %v862
        %v864 = vrot.slane %v358, 3
        %v865 = vsel %vm850, %v862, %v864
        %v866 = vrot.slane %v359, 3
        %v867 = vsel %vm850, %v864, %v866
        %v868 = vrot.slane %v360, 3
        %v869 = vsel %vm850, %v866, %v868
        %v870 = vrot.slane %v361, 3
        %v871 = vsel %vm850, %v868, %v870
        %v872 = vrot.slane %v362, 3
        %v873 = vsel %vm850, %v870, %v872
        %v874 = vrot.slane %v363, 3
        %v875 = vsel %vm850, %v872, %v874
        %v876 = vrot.slane %v364, 3
        %v877 = vsel %vm850, %v874, %v876
        %v878 = vrot.slane %v365, 3
        %v879 = vsel %vm850, %v876, %v878
        %v880 = vrot.slane %v366, 3
        %v881 = vsel %vm850, %v878, %v880
        %v882 = vrot.slane %v367, 3
        %v883 = vsel %vm850, %v880, %v882
        %v884 = vrot.slane %v368, 3
        %v885 = vsel %vm850, %v882, %v884
        %v886 = vrot.slane %v369, 3
        %v887 = vsel %vm850, %v884, %v886
        %v888 = vrot.slane %v370, 3
        %v889 = vsel %vm850, %v886, %v888
        %v890 = vrot.slane %v371, 3
        %v891 = vsel %vm850, %v888, %v890
        %v892 = vrot.slane %v372, 3
        %v893 = vsel %vm850, %v890, %v892
        %v894 = vrot.slane %v373, 3
        %v895 = vsel %vm850, %v892, %v894
        %v896 = vrot.slane %v374, 3
        %v897 = vsel %vm850, %v894, %v896
        %v898 = vrot.slane %v375, 3
        %v899 = vsel %vm850, %v896, %v898
        %v900 = vrot.slane %v376, 3
        %v901 = vsel %vm850, %v898, %v900
        %v902 = vrot.slane %v377, 3
        %v903 = vsel %vm850, %v900, %v902
        %v904 = vrot.slane %v378, 3
        %v905 = vsel %vm850, %v902, %v904
        %v906 = vrot.slane %v379, 3
        %v907 = vsel %vm850, %v904, %v906
        %v908 = vrot.slane %v380, 3
        %v909 = vsel %vm850, %v906, %v908
        %v910 = vrot.slane %v386, 3
        %v911 = vsel %vm850, %v908, %v910
        %v912 = vrot.slane %v387, 3
        %v913 = vsel %vm850, %v910, %v912
        %v914 = vrot.slane %v388, 3
        %v915 = vsel %vm850, %v912, %v914
        %916 = vrot.lane.b32.xlu0 %v853, 16
        %v917 = vpop.permute.xlu0 %916
        %918 = vrot.lane.b32.xlu0 %v855, 16
        %v919 = vpop.permute.xlu0 %918
        %920 = vrot.lane.b32.xlu0 %v857, 16
        %v921 = vpop.permute.xlu0 %920
        %922 = vrot.lane.b32.xlu0 %v859, 16
        %v923 = vpop.permute.xlu0 %922
        %924 = vrot.lane.b32.xlu0 %v861, 16
        %v925 = vpop.permute.xlu0 %924
        %926 = vrot.lane.b32.xlu0 %v863, 16
        %v927 = vpop.permute.xlu0 %926
        %928 = vrot.lane.b32.xlu0 %v865, 16
        %v929 = vpop.permute.xlu0 %928
        %930 = vrot.lane.b32.xlu0 %v867, 16
        %v931 = vpop.permute.xlu0 %930
        %932 = vrot.lane.b32.xlu0 %v869, 16
        %v933 = vpop.permute.xlu0 %932
        %934 = vrot.lane.b32.xlu0 %v871, 16
        %v935 = vpop.permute.xlu0 %934
        %936 = vrot.lane.b32.xlu0 %v873, 16
        %v937 = vpop.permute.xlu0 %936
        %938 = vrot.lane.b32.xlu0 %v875, 16
        %v939 = vpop.permute.xlu0 %938
        %940 = vrot.lane.b32.xlu0 %v877, 16
        %v941 = vpop.permute.xlu0 %940
        %942 = vrot.lane.b32.xlu0 %v879, 16
        %v943 = vpop.permute.xlu0 %942
        %944 = vrot.lane.b32.xlu0 %v881, 16
        %v945 = vpop.permute.xlu0 %944
        %946 = vrot.lane.b32.xlu0 %v883, 16
        %v947 = vpop.permute.xlu0 %946
        %948 = vrot.lane.b32.xlu0 %v885, 16
        %v949 = vpop.permute.xlu0 %948
        %950 = vrot.lane.b32.xlu0 %v887, 16
        %v951 = vpop.permute.xlu0 %950
        %952 = vrot.lane.b32.xlu0 %v889, 16
        %v953 = vpop.permute.xlu0 %952
        %954 = vrot.lane.b32.xlu0 %v891, 16
        %v955 = vpop.permute.xlu0 %954
        %956 = vrot.lane.b32.xlu0 %v893, 16
        %v957 = vpop.permute.xlu0 %956
        %958 = vrot.lane.b32.xlu0 %v895, 16
        %v959 = vpop.permute.xlu0 %958
        %960 = vrot.lane.b32.xlu0 %v897, 16
        %v961 = vpop.permute.xlu0 %960
        %962 = vrot.lane.b32.xlu0 %v899, 16
        %v963 = vpop.permute.xlu0 %962
        %964 = vrot.lane.b32.xlu0 %v901, 16
        %v965 = vpop.permute.xlu0 %964
        %966 = vrot.lane.b32.xlu0 %v903, 16
        %v967 = vpop.permute.xlu0 %966
        %968 = vrot.lane.b32.xlu0 %v905, 16
        %v969 = vpop.permute.xlu0 %968
        %970 = vrot.lane.b32.xlu0 %v907, 16
        %v971 = vpop.permute.xlu0 %970
        %972 = vrot.lane.b32.xlu0 %v909, 16
        %v973 = vpop.permute.xlu0 %972
        %974 = vrot.lane.b32.xlu0 %v911, 16
        %v975 = vpop.permute.xlu0 %974
        %976 = vrot.lane.b32.xlu0 %v913, 16
        %v977 = vpop.permute.xlu0 %976
        %978 = vrot.lane.b32.xlu0 %v915, 16
        %v979 = vpop.permute.xlu0 %978
        %vm1012 = vcmask 1043456
        %v1013 = vrot.slane %v351, 4
        %v1014 = vrot.slane %v352, 4
        %v1015 = vsel %vm1012, %v1013, %v1014
        %v1016 = vrot.slane %v353, 4
        %v1017 = vsel %vm1012, %v1014, %v1016
        %v1018 = vrot.slane %v354, 4
        %v1019 = vsel %vm1012, %v1016, %v1018
        %v1020 = vrot.slane %v355, 4
        %v1021 = vsel %vm1012, %v1018, %v1020
        %v1022 = vrot.slane %v356, 4
        %v1023 = vsel %vm1012, %v1020, %v1022
        %v1024 = vrot.slane %v357, 4
        %v1025 = vsel %vm1012, %v1022, %v1024
        %v1026 = vrot.slane %v358, 4
        %v1027 = vsel %vm1012, %v1024, %v1026
        %v1028 = vrot.slane %v359, 4
        %v1029 = vsel %vm1012, %v1026, %v1028
        %v1030 = vrot.slane %v360, 4
        %v1031 = vsel %vm1012, %v1028, %v1030
        %v1032 = vrot.slane %v361, 4
        %v1033 = vsel %vm1012, %v1030, %v1032
        %v1034 = vrot.slane %v362, 4
        %v1035 = vsel %vm1012, %v1032, %v1034
        %v1036 = vrot.slane %v363, 4
        %v1037 = vsel %vm1012, %v1034, %v1036
        %v1038 = vrot.slane %v364, 4
        %v1039 = vsel %vm1012, %v1036, %v1038
        %v1040 = vrot.slane %v365, 4
        %v1041 = vsel %vm1012, %v1038, %v1040
        %v1042 = vrot.slane %v366, 4
        %v1043 = vsel %vm1012, %v1040, %v1042
        %v1044 = vrot.slane %v367, 4
        %v1045 = vsel %vm1012, %v1042, %v1044
        %v1046 = vrot.slane %v368, 4
        %v1047 = vsel %vm1012, %v1044, %v1046
        %v1048 = vrot.slane %v369, 4
        %v1049 = vsel %vm1012, %v1046, %v1048
        %v1050 = vrot.slane %v370, 4
        %v1051 = vsel %vm1012, %v1048, %v1050
        %v1052 = vrot.slane %v371, 4
        %v1053 = vsel %vm1012, %v1050, %v1052
        %v1054 = vrot.slane %v372, 4
        %v1055 = vsel %vm1012, %v1052, %v1054
        %v1056 = vrot.slane %v373, 4
        %v1057 = vsel %vm1012, %v1054, %v1056
        %v1058 = vrot.slane %v374, 4
        %v1059 = vsel %vm1012, %v1056, %v1058
        %v1060 = vrot.slane %v375, 4
        %v1061 = vsel %vm1012, %v1058, %v1060
        %v1062 = vrot.slane %v376, 4
        %v1063 = vsel %vm1012, %v1060, %v1062
        %v1064 = vrot.slane %v377, 4
        %v1065 = vsel %vm1012, %v1062, %v1064
        %v1066 = vrot.slane %v378, 4
        %v1067 = vsel %vm1012, %v1064, %v1066
        %v1068 = vrot.slane %v379, 4
        %v1069 = vsel %vm1012, %v1066, %v1068
        %v1070 = vrot.slane %v380, 4
        %v1071 = vsel %vm1012, %v1068, %v1070
        %v1072 = vrot.slane %v386, 4
        %v1073 = vsel %vm1012, %v1070, %v1072
        %v1074 = vrot.slane %v387, 4
        %v1075 = vsel %vm1012, %v1072, %v1074
        %v1076 = vrot.slane %v388, 4
        %v1077 = vsel %vm1012, %v1074, %v1076
        %1078 = vrot.lane.b32.xlu0 %v1015, 20
        %v1079 = vpop.permute.xlu0 %1078
        %1080 = vrot.lane.b32.xlu0 %v1017, 20
        %v1081 = vpop.permute.xlu0 %1080
        %1082 = vrot.lane.b32.xlu0 %v1019, 20
        %v1083 = vpop.permute.xlu0 %1082
        %1084 = vrot.lane.b32.xlu0 %v1021, 20
        %v1085 = vpop.permute.xlu0 %1084
        %1086 = vrot.lane.b32.xlu0 %v1023, 20
        %v1087 = vpop.permute.xlu0 %1086
        %1088 = vrot.lane.b32.xlu0 %v1025, 20
        %v1089 = vpop.permute.xlu0 %1088
        %1090 = vrot.lane.b32.xlu0 %v1027, 20
        %v1091 = vpop.permute.xlu0 %1090
        %1092 = vrot.lane.b32.xlu0 %v1029, 20
        %v1093 = vpop.permute.xlu0 %1092
        %1094 = vrot.lane.b32.xlu0 %v1031, 20
        %v1095 = vpop.permute.xlu0 %1094
        %1096 = vrot.lane.b32.xlu0 %v1033, 20
        %v1097 = vpop.permute.xlu0 %1096
        %1098 = vrot.lane.b32.xlu0 %v1035, 20
        %v1099 = vpop.permute.xlu0 %1098
        %1100 = vrot.lane.b32.xlu0 %v1037, 20
        %v1101 = vpop.permute.xlu0 %1100
        %1102 = vrot.lane.b32.xlu0 %v1039, 20
        %v1103 = vpop.permute.xlu0 %1102
        %1104 = vrot.lane.b32.xlu0 %v1041, 20
        %v1105 = vpop.permute.xlu0 %1104
        %1106 = vrot.lane.b32.xlu0 %v1043, 20
        %v1107 = vpop.permute.xlu0 %1106
        %1108 = vrot.lane.b32.xlu0 %v1045, 20
        %v1109 = vpop.permute.xlu0 %1108
        %1110 = vrot.lane.b32.xlu0 %v1047, 20
        %v1111 = vpop.permute.xlu0 %1110
        %1112 = vrot.lane.b32.xlu0 %v1049, 20
        %v1113 = vpop.permute.xlu0 %1112
        %1114 = vrot.lane.b32.xlu0 %v1051, 20
        %v1115 = vpop.permute.xlu0 %1114
        %1116 = vrot.lane.b32.xlu0 %v1053, 20
        %v1117 = vpop.permute.xlu0 %1116
        %1118 = vrot.lane.b32.xlu0 %v1055, 20
        %v1119 = vpop.permute.xlu0 %1118
        %1120 = vrot.lane.b32.xlu0 %v1057, 20
        %v1121 = vpop.permute.xlu0 %1120
        %1122 = vrot.lane.b32.xlu0 %v1059, 20
        %v1123 = vpop.permute.xlu0 %1122
        %1124 = vrot.lane.b32.xlu0 %v1061, 20
        %v1125 = vpop.permute.xlu0 %1124
        %1126 = vrot.lane.b32.xlu0 %v1063, 20
        %v1127 = vpop.permute.xlu0 %1126
        %1128 = vrot.lane.b32.xlu0 %v1065, 20
        %v1129 = vpop.permute.xlu0 %1128
        %1130 = vrot.lane.b32.xlu0 %v1067, 20
        %v1131 = vpop.permute.xlu0 %1130
        %1132 = vrot.lane.b32.xlu0 %v1069, 20
        %v1133 = vpop.permute.xlu0 %1132
        %1134 = vrot.lane.b32.xlu0 %v1071, 20
        %v1135 = vpop.permute.xlu0 %1134
        %1136 = vrot.lane.b32.xlu0 %v1073, 20
        %v1137 = vpop.permute.xlu0 %1136
        %1138 = vrot.lane.b32.xlu0 %v1075, 20
        %v1139 = vpop.permute.xlu0 %1138
        %1140 = vrot.lane.b32.xlu0 %v1077, 20
        %v1141 = vpop.permute.xlu0 %1140
        %v1176 = vrot.slane %v389, 4
        %v1177 = vsel %vm1012, %v1076, %v1176
        %v1178 = vrot.slane %v390, 4
        %v1179 = vsel %vm1012, %v1176, %v1178
        %1180 = vrot.lane.b32.xlu0 %v1019, 24
        %v1181 = vpop.permute.xlu0 %1180
        %1182 = vrot.lane.b32.xlu0 %v1021, 24
        %v1183 = vpop.permute.xlu0 %1182
        %1184 = vrot.lane.b32.xlu0 %v1023, 24
        %v1185 = vpop.permute.xlu0 %1184
        %1186 = vrot.lane.b32.xlu0 %v1025, 24
        %v1187 = vpop.permute.xlu0 %1186
        %1188 = vrot.lane.b32.xlu0 %v1027, 24
        %v1189 = vpop.permute.xlu0 %1188
        %1190 = vrot.lane.b32.xlu0 %v1029, 24
        %v1191 = vpop.permute.xlu0 %1190
        %1192 = vrot.lane.b32.xlu0 %v1031, 24
        %v1193 = vpop.permute.xlu0 %1192
        %1194 = vrot.lane.b32.xlu0 %v1033, 24
        %v1195 = vpop.permute.xlu0 %1194
        %1196 = vrot.lane.b32.xlu0 %v1035, 24
        %v1197 = vpop.permute.xlu0 %1196
        %1198 = vrot.lane.b32.xlu0 %v1037, 24
        %v1199 = vpop.permute.xlu0 %1198
        %1200 = vrot.lane.b32.xlu0 %v1039, 24
        %v1201 = vpop.permute.xlu0 %1200
        %1202 = vrot.lane.b32.xlu0 %v1041, 24
        %v1203 = vpop.permute.xlu0 %1202
        %1204 = vrot.lane.b32.xlu0 %v1043, 24
        %v1205 = vpop.permute.xlu0 %1204
        %1206 = vrot.lane.b32.xlu0 %v1045, 24
        %v1207 = vpop.permute.xlu0 %1206
        %1208 = vrot.lane.b32.xlu0 %v1047, 24
        %v1209 = vpop.permute.xlu0 %1208
        %1210 = vrot.lane.b32.xlu0 %v1049, 24
        %v1211 = vpop.permute.xlu0 %1210
        %1212 = vrot.lane.b32.xlu0 %v1051, 24
        %v1213 = vpop.permute.xlu0 %1212
        %1214 = vrot.lane.b32.xlu0 %v1053, 24
        %v1215 = vpop.permute.xlu0 %1214
        %1216 = vrot.lane.b32.xlu0 %v1055, 24
        %v1217 = vpop.permute.xlu0 %1216
        %1218 = vrot.lane.b32.xlu0 %v1057, 24
        %v1219 = vpop.permute.xlu0 %1218
        %1220 = vrot.lane.b32.xlu0 %v1059, 24
        %v1221 = vpop.permute.xlu0 %1220
        %1222 = vrot.lane.b32.xlu0 %v1061, 24
        %v1223 = vpop.permute.xlu0 %1222
        %1224 = vrot.lane.b32.xlu0 %v1063, 24
        %v1225 = vpop.permute.xlu0 %1224
        %1226 = vrot.lane.b32.xlu0 %v1065, 24
        %v1227 = vpop.permute.xlu0 %1226
        %1228 = vrot.lane.b32.xlu0 %v1067, 24
        %v1229 = vpop.permute.xlu0 %1228
        %1230 = vrot.lane.b32.xlu0 %v1069, 24
        %v1231 = vpop.permute.xlu0 %1230
        %1232 = vrot.lane.b32.xlu0 %v1071, 24
        %v1233 = vpop.permute.xlu0 %1232
        %1234 = vrot.lane.b32.xlu0 %v1073, 24
        %v1235 = vpop.permute.xlu0 %1234
        %1236 = vrot.lane.b32.xlu0 %v1075, 24
        %v1237 = vpop.permute.xlu0 %1236
        %1238 = vrot.lane.b32.xlu0 %v1077, 24
        %v1239 = vpop.permute.xlu0 %1238
        %1240 = vrot.lane.b32.xlu0 %v1177, 24
        %v1241 = vpop.permute.xlu0 %1240
        %1242 = vrot.lane.b32.xlu0 %v1179, 24
        %v1243 = vpop.permute.xlu0 %1242
        %vm1276 = vcmask 1042432
        %v1277 = vrot.slane %v353, 5
        %v1278 = vrot.slane %v354, 5
        %v1279 = vsel %vm1276, %v1277, %v1278
        %v1280 = vrot.slane %v355, 5
        %v1281 = vsel %vm1276, %v1278, %v1280
        %v1282 = vrot.slane %v356, 5
        %v1283 = vsel %vm1276, %v1280, %v1282
        %v1284 = vrot.slane %v357, 5
        %v1285 = vsel %vm1276, %v1282, %v1284
        %v1286 = vrot.slane %v358, 5
        %v1287 = vsel %vm1276, %v1284, %v1286
        %v1288 = vrot.slane %v359, 5
        %v1289 = vsel %vm1276, %v1286, %v1288
        %v1290 = vrot.slane %v360, 5
        %v1291 = vsel %vm1276, %v1288, %v1290
        %v1292 = vrot.slane %v361, 5
        %v1293 = vsel %vm1276, %v1290, %v1292
        %v1294 = vrot.slane %v362, 5
        %v1295 = vsel %vm1276, %v1292, %v1294
        %v1296 = vrot.slane %v363, 5
        %v1297 = vsel %vm1276, %v1294, %v1296
        %v1298 = vrot.slane %v364, 5
        %v1299 = vsel %vm1276, %v1296, %v1298
        %v1300 = vrot.slane %v365, 5
        %v1301 = vsel %vm1276, %v1298, %v1300
        %v1302 = vrot.slane %v366, 5
        %v1303 = vsel %vm1276, %v1300, %v1302
        %v1304 = vrot.slane %v367, 5
        %v1305 = vsel %vm1276, %v1302, %v1304
        %v1306 = vrot.slane %v368, 5
        %v1307 = vsel %vm1276, %v1304, %v1306
        %v1308 = vrot.slane %v369, 5
        %v1309 = vsel %vm1276, %v1306, %v1308
        %v1310 = vrot.slane %v370, 5
        %v1311 = vsel %vm1276, %v1308, %v1310
        %v1312 = vrot.slane %v371, 5
        %v1313 = vsel %vm1276, %v1310, %v1312
        %v1314 = vrot.slane %v372, 5
        %v1315 = vsel %vm1276, %v1312, %v1314
        %v1316 = vrot.slane %v373, 5
        %v1317 = vsel %vm1276, %v1314, %v1316
        %v1318 = vrot.slane %v374, 5
        %v1319 = vsel %vm1276, %v1316, %v1318
        %v1320 = vrot.slane %v375, 5
        %v1321 = vsel %vm1276, %v1318, %v1320
        %v1322 = vrot.slane %v376, 5
        %v1323 = vsel %vm1276, %v1320, %v1322
        %v1324 = vrot.slane %v377, 5
        %v1325 = vsel %vm1276, %v1322, %v1324
        %v1326 = vrot.slane %v378, 5
        %v1327 = vsel %vm1276, %v1324, %v1326
        %v1328 = vrot.slane %v379, 5
        %v1329 = vsel %vm1276, %v1326, %v1328
        %v1330 = vrot.slane %v380, 5
        %v1331 = vsel %vm1276, %v1328, %v1330
        %v1332 = vrot.slane %v386, 5
        %v1333 = vsel %vm1276, %v1330, %v1332
        %v1334 = vrot.slane %v387, 5
        %v1335 = vsel %vm1276, %v1332, %v1334
        %v1336 = vrot.slane %v388, 5
        %v1337 = vsel %vm1276, %v1334, %v1336
        %v1338 = vrot.slane %v389, 5
        %v1339 = vsel %vm1276, %v1336, %v1338
        %v1340 = vrot.slane %v390, 5
        %v1341 = vsel %vm1276, %v1338, %v1340
        %1342 = vrot.lane.b32.xlu0 %v1279, 28
        %v1343 = vpop.permute.xlu0 %1342
        %1344 = vrot.lane.b32.xlu0 %v1281, 28
        %v1345 = vpop.permute.xlu0 %1344
        %1346 = vrot.lane.b32.xlu0 %v1283, 28
        %v1347 = vpop.permute.xlu0 %1346
        %1348 = vrot.lane.b32.xlu0 %v1285, 28
        %v1349 = vpop.permute.xlu0 %1348
        %1350 = vrot.lane.b32.xlu0 %v1287, 28
        %v1351 = vpop.permute.xlu0 %1350
        %1352 = vrot.lane.b32.xlu0 %v1289, 28
        %v1353 = vpop.permute.xlu0 %1352
        %1354 = vrot.lane.b32.xlu0 %v1291, 28
        %v1355 = vpop.permute.xlu0 %1354
        %1356 = vrot.lane.b32.xlu0 %v1293, 28
        %v1357 = vpop.permute.xlu0 %1356
        %1358 = vrot.lane.b32.xlu0 %v1295, 28
        %v1359 = vpop.permute.xlu0 %1358
        %1360 = vrot.lane.b32.xlu0 %v1297, 28
        %v1361 = vpop.permute.xlu0 %1360
        %1362 = vrot.lane.b32.xlu0 %v1299, 28
        %v1363 = vpop.permute.xlu0 %1362
        %1364 = vrot.lane.b32.xlu0 %v1301, 28
        %v1365 = vpop.permute.xlu0 %1364
        %1366 = vrot.lane.b32.xlu0 %v1303, 28
        %v1367 = vpop.permute.xlu0 %1366
        %1368 = vrot.lane.b32.xlu0 %v1305, 28
        %v1369 = vpop.permute.xlu0 %1368
        %1370 = vrot.lane.b32.xlu0 %v1307, 28
        %v1371 = vpop.permute.xlu0 %1370
        %1372 = vrot.lane.b32.xlu0 %v1309, 28
        %v1373 = vpop.permute.xlu0 %1372
        %1374 = vrot.lane.b32.xlu0 %v1311, 28
        %v1375 = vpop.permute.xlu0 %1374
        %1376 = vrot.lane.b32.xlu0 %v1313, 28
        %v1377 = vpop.permute.xlu0 %1376
        %1378 = vrot.lane.b32.xlu0 %v1315, 28
        %v1379 = vpop.permute.xlu0 %1378
        %1380 = vrot.lane.b32.xlu0 %v1317, 28
        %v1381 = vpop.permute.xlu0 %1380
        %1382 = vrot.lane.b32.xlu0 %v1319, 28
        %v1383 = vpop.permute.xlu0 %1382
        %1384 = vrot.lane.b32.xlu0 %v1321, 28
        %v1385 = vpop.permute.xlu0 %1384
        %1386 = vrot.lane.b32.xlu0 %v1323, 28
        %v1387 = vpop.permute.xlu0 %1386
        %1388 = vrot.lane.b32.xlu0 %v1325, 28
        %v1389 = vpop.permute.xlu0 %1388
        %1390 = vrot.lane.b32.xlu0 %v1327, 28
        %v1391 = vpop.permute.xlu0 %1390
        %1392 = vrot.lane.b32.xlu0 %v1329, 28
        %v1393 = vpop.permute.xlu0 %1392
        %1394 = vrot.lane.b32.xlu0 %v1331, 28
        %v1395 = vpop.permute.xlu0 %1394
        %1396 = vrot.lane.b32.xlu0 %v1333, 28
        %v1397 = vpop.permute.xlu0 %1396
        %1398 = vrot.lane.b32.xlu0 %v1335, 28
        %v1399 = vpop.permute.xlu0 %1398
        %1400 = vrot.lane.b32.xlu0 %v1337, 28
        %v1401 = vpop.permute.xlu0 %1400
        %1402 = vrot.lane.b32.xlu0 %v1339, 28
        %v1403 = vpop.permute.xlu0 %1402
        %1404 = vrot.lane.b32.xlu0 %v1341, 28
        %v1405 = vpop.permute.xlu0 %1404
        %vm1438 = vcmask 1041408
        %v1439 = vrot.slane %v353, 6
        %v1440 = vrot.slane %v354, 6
        %v1441 = vsel %vm1438, %v1439, %v1440
        %v1442 = vrot.slane %v355, 6
        %v1443 = vsel %vm1438, %v1440, %v1442
        %v1444 = vrot.slane %v356, 6
        %v1445 = vsel %vm1438, %v1442, %v1444
        %v1446 = vrot.slane %v357, 6
        %v1447 = vsel %vm1438, %v1444, %v1446
        %v1448 = vrot.slane %v358, 6
        %v1449 = vsel %vm1438, %v1446, %v1448
        %v1450 = vrot.slane %v359, 6
        %v1451 = vsel %vm1438, %v1448, %v1450
        %v1452 = vrot.slane %v360, 6
        %v1453 = vsel %vm1438, %v1450, %v1452
        %v1454 = vrot.slane %v361, 6
        %v1455 = vsel %vm1438, %v1452, %v1454
        %v1456 = vrot.slane %v362, 6
        %v1457 = vsel %vm1438, %v1454, %v1456
        %v1458 = vrot.slane %v363, 6
        %v1459 = vsel %vm1438, %v1456, %v1458
        %v1460 = vrot.slane %v364, 6
        %v1461 = vsel %vm1438, %v1458, %v1460
        %v1462 = vrot.slane %v365, 6
        %v1463 = vsel %vm1438, %v1460, %v1462
        %v1464 = vrot.slane %v366, 6
        %v1465 = vsel %vm1438, %v1462, %v1464
        %v1466 = vrot.slane %v367, 6
        %v1467 = vsel %vm1438, %v1464, %v1466
        %v1468 = vrot.slane %v368, 6
        %v1469 = vsel %vm1438, %v1466, %v1468
        %v1470 = vrot.slane %v369, 6
        %v1471 = vsel %vm1438, %v1468, %v1470
        %v1472 = vrot.slane %v370, 6
        %v1473 = vsel %vm1438, %v1470, %v1472
        %v1474 = vrot.slane %v371, 6
        %v1475 = vsel %vm1438, %v1472, %v1474
        %v1476 = vrot.slane %v372, 6
        %v1477 = vsel %vm1438, %v1474, %v1476
        %v1478 = vrot.slane %v373, 6
        %v1479 = vsel %vm1438, %v1476, %v1478
        %v1480 = vrot.slane %v374, 6
        %v1481 = vsel %vm1438, %v1478, %v1480
        %v1482 = vrot.slane %v375, 6
        %v1483 = vsel %vm1438, %v1480, %v1482
        %v1484 = vrot.slane %v376, 6
        %v1485 = vsel %vm1438, %v1482, %v1484
        %v1486 = vrot.slane %v377, 6
        %v1487 = vsel %vm1438, %v1484, %v1486
        %v1488 = vrot.slane %v378, 6
        %v1489 = vsel %vm1438, %v1486, %v1488
        %v1490 = vrot.slane %v379, 6
        %v1491 = vsel %vm1438, %v1488, %v1490
        %v1492 = vrot.slane %v380, 6
        %v1493 = vsel %vm1438, %v1490, %v1492
        %v1494 = vrot.slane %v386, 6
        %v1495 = vsel %vm1438, %v1492, %v1494
        %v1496 = vrot.slane %v387, 6
        %v1497 = vsel %vm1438, %v1494, %v1496
        %v1498 = vrot.slane %v388, 6
        %v1499 = vsel %vm1438, %v1496, %v1498
        %v1500 = vrot.slane %v389, 6
        %v1501 = vsel %vm1438, %v1498, %v1500
        %v1502 = vrot.slane %v390, 6
        %v1503 = vsel %vm1438, %v1500, %v1502
        %1504 = vrot.lane.b32.xlu0 %v1441, 32
        %v1505 = vpop.permute.xlu0 %1504
        %1506 = vrot.lane.b32.xlu0 %v1443, 32
        %v1507 = vpop.permute.xlu0 %1506
        %1508 = vrot.lane.b32.xlu0 %v1445, 32
        %v1509 = vpop.permute.xlu0 %1508
        %1510 = vrot.lane.b32.xlu0 %v1447, 32
        %v1511 = vpop.permute.xlu0 %1510
        %1512 = vrot.lane.b32.xlu0 %v1449, 32
        %v1513 = vpop.permute.xlu0 %1512
        %1514 = vrot.lane.b32.xlu0 %v1451, 32
        %v1515 = vpop.permute.xlu0 %1514
        %1516 = vrot.lane.b32.xlu0 %v1453, 32
        %v1517 = vpop.permute.xlu0 %1516
        %1518 = vrot.lane.b32.xlu0 %v1455, 32
        %v1519 = vpop.permute.xlu0 %1518
        %1520 = vrot.lane.b32.xlu0 %v1457, 32
        %v1521 = vpop.permute.xlu0 %1520
        %1522 = vrot.lane.b32.xlu0 %v1459, 32
        %v1523 = vpop.permute.xlu0 %1522
        %1524 = vrot.lane.b32.xlu0 %v1461, 32
        %v1525 = vpop.permute.xlu0 %1524
        %1526 = vrot.lane.b32.xlu0 %v1463, 32
        %v1527 = vpop.permute.xlu0 %1526
        %1528 = vrot.lane.b32.xlu0 %v1465, 32
        %v1529 = vpop.permute.xlu0 %1528
        %1530 = vrot.lane.b32.xlu0 %v1467, 32
        %v1531 = vpop.permute.xlu0 %1530
        %1532 = vrot.lane.b32.xlu0 %v1469, 32
        %v1533 = vpop.permute.xlu0 %1532
        %1534 = vrot.lane.b32.xlu0 %v1471, 32
        %v1535 = vpop.permute.xlu0 %1534
        %1536 = vrot.lane.b32.xlu0 %v1473, 32
        %v1537 = vpop.permute.xlu0 %1536
        %1538 = vrot.lane.b32.xlu0 %v1475, 32
        %v1539 = vpop.permute.xlu0 %1538
        %1540 = vrot.lane.b32.xlu0 %v1477, 32
        %v1541 = vpop.permute.xlu0 %1540
        %1542 = vrot.lane.b32.xlu0 %v1479, 32
        %v1543 = vpop.permute.xlu0 %1542
        %1544 = vrot.lane.b32.xlu0 %v1481, 32
        %v1545 = vpop.permute.xlu0 %1544
        %1546 = vrot.lane.b32.xlu0 %v1483, 32
        %v1547 = vpop.permute.xlu0 %1546
        %1548 = vrot.lane.b32.xlu0 %v1485, 32
        %v1549 = vpop.permute.xlu0 %1548
        %1550 = vrot.lane.b32.xlu0 %v1487, 32
        %v1551 = vpop.permute.xlu0 %1550
        %1552 = vrot.lane.b32.xlu0 %v1489, 32
        %v1553 = vpop.permute.xlu0 %1552
        %1554 = vrot.lane.b32.xlu0 %v1491, 32
        %v1555 = vpop.permute.xlu0 %1554
        %1556 = vrot.lane.b32.xlu0 %v1493, 32
        %v1557 = vpop.permute.xlu0 %1556
        %1558 = vrot.lane.b32.xlu0 %v1495, 32
        %v1559 = vpop.permute.xlu0 %1558
        %1560 = vrot.lane.b32.xlu0 %v1497, 32
        %v1561 = vpop.permute.xlu0 %1560
        %1562 = vrot.lane.b32.xlu0 %v1499, 32
        %v1563 = vpop.permute.xlu0 %1562
        %1564 = vrot.lane.b32.xlu0 %v1501, 32
        %v1565 = vpop.permute.xlu0 %1564
        %1566 = vrot.lane.b32.xlu0 %v1503, 32
        %v1567 = vpop.permute.xlu0 %1566
        %vm1600 = vcmask 31744
        %v1601 = vsel %vm1600, %v349, %v491
        %v1602 = vsel %vm1600, %v350, %v493
        %v1603 = vsel %vm1600, %v351, %v495
        %v1604 = vsel %vm1600, %v352, %v497
        %v1605 = vsel %vm1600, %v353, %v499
        %v1606 = vsel %vm1600, %v354, %v501
        %v1607 = vsel %vm1600, %v355, %v503
        %v1608 = vsel %vm1600, %v356, %v505
        %v1609 = vsel %vm1600, %v357, %v507
        %v1610 = vsel %vm1600, %v358, %v509
        %v1611 = vsel %vm1600, %v359, %v511
        %v1612 = vsel %vm1600, %v360, %v513
        %v1613 = vsel %vm1600, %v361, %v515
        %v1614 = vsel %vm1600, %v362, %v517
        %v1615 = vsel %vm1600, %v363, %v519
        %v1616 = vsel %vm1600, %v364, %v521
        %v1617 = vsel %vm1600, %v365, %v523
        %v1618 = vsel %vm1600, %v366, %v525
        %v1619 = vsel %vm1600, %v367, %v527
        %v1620 = vsel %vm1600, %v368, %v529
        %v1621 = vsel %vm1600, %v369, %v531
        %v1622 = vsel %vm1600, %v370, %v533
        %v1623 = vsel %vm1600, %v371, %v535
        %v1624 = vsel %vm1600, %v372, %v537
        %v1625 = vsel %vm1600, %v373, %v539
        %v1626 = vsel %vm1600, %v374, %v541
        %v1627 = vsel %vm1600, %v375, %v543
        %v1628 = vsel %vm1600, %v376, %v545
        %v1629 = vsel %vm1600, %v377, %v547
        %v1630 = vsel %vm1600, %v378, %v549
        %v1631 = vsel %vm1600, %v379, %v551
        %v1632 = vsel %vm1600, %v380, %v553
        %vm1633 = vcmask 64512
        %v1634 = vsel %vm1633, %v1601, %v653
        %v1635 = vsel %vm1633, %v1602, %v655
        %v1636 = vsel %vm1633, %v1603, %v657
        %v1637 = vsel %vm1633, %v1604, %v659
        %v1638 = vsel %vm1633, %v1605, %v661
        %v1639 = vsel %vm1633, %v1606, %v663
        %v1640 = vsel %vm1633, %v1607, %v665
        %v1641 = vsel %vm1633, %v1608, %v667
        %v1642 = vsel %vm1633, %v1609, %v669
        %v1643 = vsel %vm1633, %v1610, %v671
        %v1644 = vsel %vm1633, %v1611, %v673
        %v1645 = vsel %vm1633, %v1612, %v675
        %v1646 = vsel %vm1633, %v1613, %v677
        %v1647 = vsel %vm1633, %v1614, %v679
        %v1648 = vsel %vm1633, %v1615, %v681
        %v1649 = vsel %vm1633, %v1616, %v683
        %v1650 = vsel %vm1633, %v1617, %v685
        %v1651 = vsel %vm1633, %v1618, %v687
        %v1652 = vsel %vm1633, %v1619, %v689
        %v1653 = vsel %vm1633, %v1620, %v691
        %v1654 = vsel %vm1633, %v1621, %v693
        %v1655 = vsel %vm1633, %v1622, %v695
        %v1656 = vsel %vm1633, %v1623, %v697
        %v1657 = vsel %vm1633, %v1624, %v699
        %v1658 = vsel %vm1633, %v1625, %v701
        %v1659 = vsel %vm1633, %v1626, %v703
        %v1660 = vsel %vm1633, %v1627, %v705
        %v1661 = vsel %vm1633, %v1628, %v707
        %v1662 = vsel %vm1633, %v1629, %v709
        %v1663 = vsel %vm1633, %v1630, %v711
        %v1664 = vsel %vm1633, %v1631, %v713
        %v1665 = vsel %vm1633, %v1632, %v715
        %vm1666 = vcmask 97280
        %v1667 = vsel %vm1666, %v1634, %v755
        %v1668 = vsel %vm1666, %v1635, %v757
        %v1669 = vsel %vm1666, %v1636, %v759
        %v1670 = vsel %vm1666, %v1637, %v761
        %v1671 = vsel %vm1666, %v1638, %v763
        %v1672 = vsel %vm1666, %v1639, %v765
        %v1673 = vsel %vm1666, %v1640, %v767
        %v1674 = vsel %vm1666, %v1641, %v769
        %v1675 = vsel %vm1666, %v1642, %v771
        %v1676 = vsel %vm1666, %v1643, %v773
        %v1677 = vsel %vm1666, %v1644, %v775
        %v1678 = vsel %vm1666, %v1645, %v777
        %v1679 = vsel %vm1666, %v1646, %v779
        %v1680 = vsel %vm1666, %v1647, %v781
        %v1681 = vsel %vm1666, %v1648, %v783
        %v1682 = vsel %vm1666, %v1649, %v785
        %v1683 = vsel %vm1666, %v1650, %v787
        %v1684 = vsel %vm1666, %v1651, %v789
        %v1685 = vsel %vm1666, %v1652, %v791
        %v1686 = vsel %vm1666, %v1653, %v793
        %v1687 = vsel %vm1666, %v1654, %v795
        %v1688 = vsel %vm1666, %v1655, %v797
        %v1689 = vsel %vm1666, %v1656, %v799
        %v1690 = vsel %vm1666, %v1657, %v801
        %v1691 = vsel %vm1666, %v1658, %v803
        %v1692 = vsel %vm1666, %v1659, %v805
        %v1693 = vsel %vm1666, %v1660, %v807
        %v1694 = vsel %vm1666, %v1661, %v809
        %v1695 = vsel %vm1666, %v1662, %v811
        %v1696 = vsel %vm1666, %v1663, %v813
        %v1697 = vsel %vm1666, %v1664, %v815
        %v1698 = vsel %vm1666, %v1665, %v817
        %vm1699 = vcmask 130048
        %v1700 = vsel %vm1699, %v1667, %v917
        %v1701 = vsel %vm1699, %v1668, %v919
        %v1702 = vsel %vm1699, %v1669, %v921
        %v1703 = vsel %vm1699, %v1670, %v923
        %v1704 = vsel %vm1699, %v1671, %v925
        %v1705 = vsel %vm1699, %v1672, %v927
        %v1706 = vsel %vm1699, %v1673, %v929
        %v1707 = vsel %vm1699, %v1674, %v931
        %v1708 = vsel %vm1699, %v1675, %v933
        %v1709 = vsel %vm1699, %v1676, %v935
        %v1710 = vsel %vm1699, %v1677, %v937
        %v1711 = vsel %vm1699, %v1678, %v939
        %v1712 = vsel %vm1699, %v1679, %v941
        %v1713 = vsel %vm1699, %v1680, %v943
        %v1714 = vsel %vm1699, %v1681, %v945
        %v1715 = vsel %vm1699, %v1682, %v947
        %v1716 = vsel %vm1699, %v1683, %v949
        %v1717 = vsel %vm1699, %v1684, %v951
        %v1718 = vsel %vm1699, %v1685, %v953
        %v1719 = vsel %vm1699, %v1686, %v955
        %v1720 = vsel %vm1699, %v1687, %v957
        %v1721 = vsel %vm1699, %v1688, %v959
        %v1722 = vsel %vm1699, %v1689, %v961
        %v1723 = vsel %vm1699, %v1690, %v963
        %v1724 = vsel %vm1699, %v1691, %v965
        %v1725 = vsel %vm1699, %v1692, %v967
        %v1726 = vsel %vm1699, %v1693, %v969
        %v1727 = vsel %vm1699, %v1694, %v971
        %v1728 = vsel %vm1699, %v1695, %v973
        %v1729 = vsel %vm1699, %v1696, %v975
        %v1730 = vsel %vm1699, %v1697, %v977
        %v1731 = vsel %vm1699, %v1698, %v979
        %vm1732 = vcmask 162816
        %v1733 = vsel %vm1732, %v1700, %v1079
        %v1734 = vsel %vm1732, %v1701, %v1081
        %v1735 = vsel %vm1732, %v1702, %v1083
        %v1736 = vsel %vm1732, %v1703, %v1085
        %v1737 = vsel %vm1732, %v1704, %v1087
        %v1738 = vsel %vm1732, %v1705, %v1089
        %v1739 = vsel %vm1732, %v1706, %v1091
        %v1740 = vsel %vm1732, %v1707, %v1093
        %v1741 = vsel %vm1732, %v1708, %v1095
        %v1742 = vsel %vm1732, %v1709, %v1097
        %v1743 = vsel %vm1732, %v1710, %v1099
        %v1744 = vsel %vm1732, %v1711, %v1101
        %v1745 = vsel %vm1732, %v1712, %v1103
        %v1746 = vsel %vm1732, %v1713, %v1105
        %v1747 = vsel %vm1732, %v1714, %v1107
        %v1748 = vsel %vm1732, %v1715, %v1109
        %v1749 = vsel %vm1732, %v1716, %v1111
        %v1750 = vsel %vm1732, %v1717, %v1113
        %v1751 = vsel %vm1732, %v1718, %v1115
        %v1752 = vsel %vm1732, %v1719, %v1117
        %v1753 = vsel %vm1732, %v1720, %v1119
        %v1754 = vsel %vm1732, %v1721, %v1121
        %v1755 = vsel %vm1732, %v1722, %v1123
        %v1756 = vsel %vm1732, %v1723, %v1125
        %v1757 = vsel %vm1732, %v1724, %v1127
        %v1758 = vsel %vm1732, %v1725, %v1129
        %v1759 = vsel %vm1732, %v1726, %v1131
        %v1760 = vsel %vm1732, %v1727, %v1133
        %v1761 = vsel %vm1732, %v1728, %v1135
        %v1762 = vsel %vm1732, %v1729, %v1137
        %v1763 = vsel %vm1732, %v1730, %v1139
        %v1764 = vsel %vm1732, %v1731, %v1141
        %vm1765 = vcmask 195584
        %v1766 = vsel %vm1765, %v1733, %v1181
        %v1767 = vsel %vm1765, %v1734, %v1183
        %v1768 = vsel %vm1765, %v1735, %v1185
        %v1769 = vsel %vm1765, %v1736, %v1187
        %v1770 = vsel %vm1765, %v1737, %v1189
        %v1771 = vsel %vm1765, %v1738, %v1191
        %v1772 = vsel %vm1765, %v1739, %v1193
        %v1773 = vsel %vm1765, %v1740, %v1195
        %v1774 = vsel %vm1765, %v1741, %v1197
        %v1775 = vsel %vm1765, %v1742, %v1199
        %v1776 = vsel %vm1765, %v1743, %v1201
        %v1777 = vsel %vm1765, %v1744, %v1203
        %v1778 = vsel %vm1765, %v1745, %v1205
        %v1779 = vsel %vm1765, %v1746, %v1207
        %v1780 = vsel %vm1765, %v1747, %v1209
        %v1781 = vsel %vm1765, %v1748, %v1211
        %v1782 = vsel %vm1765, %v1749, %v1213
        %v1783 = vsel %vm1765, %v1750, %v1215
        %v1784 = vsel %vm1765, %v1751, %v1217
        %v1785 = vsel %vm1765, %v1752, %v1219
        %v1786 = vsel %vm1765, %v1753, %v1221
        %v1787 = vsel %vm1765, %v1754, %v1223
        %v1788 = vsel %vm1765, %v1755, %v1225
        %v1789 = vsel %vm1765, %v1756, %v1227
        %v1790 = vsel %vm1765, %v1757, %v1229
        %v1791 = vsel %vm1765, %v1758, %v1231
        %v1792 = vsel %vm1765, %v1759, %v1233
        %v1793 = vsel %vm1765, %v1760, %v1235
        %v1794 = vsel %vm1765, %v1761, %v1237
        %v1795 = vsel %vm1765, %v1762, %v1239
        %v1796 = vsel %vm1765, %v1763, %v1241
        %v1797 = vsel %vm1765, %v1764, %v1243
        %vm1798 = vcmask 228352
        %v1799 = vsel %vm1798, %v1766, %v1343
        %v1800 = vsel %vm1798, %v1767, %v1345
        %v1801 = vsel %vm1798, %v1768, %v1347
        %v1802 = vsel %vm1798, %v1769, %v1349
        %v1803 = vsel %vm1798, %v1770, %v1351
        %v1804 = vsel %vm1798, %v1771, %v1353
        %v1805 = vsel %vm1798, %v1772, %v1355
        %v1806 = vsel %vm1798, %v1773, %v1357
        %v1807 = vsel %vm1798, %v1774, %v1359
        %v1808 = vsel %vm1798, %v1775, %v1361
        %v1809 = vsel %vm1798, %v1776, %v1363
        %v1810 = vsel %vm1798, %v1777, %v1365
        %v1811 = vsel %vm1798, %v1778, %v1367
        %v1812 = vsel %vm1798, %v1779, %v1369
        %v1813 = vsel %vm1798, %v1780, %v1371
        %v1814 = vsel %vm1798, %v1781, %v1373
        %v1815 = vsel %vm1798, %v1782, %v1375
        %v1816 = vsel %vm1798, %v1783, %v1377
        %v1817 = vsel %vm1798, %v1784, %v1379
        %v1818 = vsel %vm1798, %v1785, %v1381
        %v1819 = vsel %vm1798, %v1786, %v1383
        %v1820 = vsel %vm1798, %v1787, %v1385
        %v1821 = vsel %vm1798, %v1788, %v1387
        %v1822 = vsel %vm1798, %v1789, %v1389
        %v1823 = vsel %vm1798, %v1790, %v1391
        %v1824 = vsel %vm1798, %v1791, %v1393
        %v1825 = vsel %vm1798, %v1792, %v1395
        %v1826 = vsel %vm1798, %v1793, %v1397
        %v1827 = vsel %vm1798, %v1794, %v1399
        %v1828 = vsel %vm1798, %v1795, %v1401
        %v1829 = vsel %vm1798, %v1796, %v1403
        %v1830 = vsel %vm1798, %v1797, %v1405
        %vm1831 = vcmask 261120
        %v1832 = vsel %vm1831, %v1799, %v1505
        %v1833 = vsel %vm1831, %v1800, %v1507
        %v1834 = vsel %vm1831, %v1801, %v1509
        %v1835 = vsel %vm1831, %v1802, %v1511
        %v1836 = vsel %vm1831, %v1803, %v1513
        %v1837 = vsel %vm1831, %v1804, %v1515
        %v1838 = vsel %vm1831, %v1805, %v1517
        %v1839 = vsel %vm1831, %v1806, %v1519
        %v1840 = vsel %vm1831, %v1807, %v1521
        %v1841 = vsel %vm1831, %v1808, %v1523
        %v1842 = vsel %vm1831, %v1809, %v1525
        %v1843 = vsel %vm1831, %v1810, %v1527
        %v1844 = vsel %vm1831, %v1811, %v1529
        %v1845 = vsel %vm1831, %v1812, %v1531
        %v1846 = vsel %vm1831, %v1813, %v1533
        %v1847 = vsel %vm1831, %v1814, %v1535
        %v1848 = vsel %vm1831, %v1815, %v1537
        %v1849 = vsel %vm1831, %v1816, %v1539
        %v1850 = vsel %vm1831, %v1817, %v1541
        %v1851 = vsel %vm1831, %v1818, %v1543
        %v1852 = vsel %vm1831, %v1819, %v1545
        %v1853 = vsel %vm1831, %v1820, %v1547
        %v1854 = vsel %vm1831, %v1821, %v1549
        %v1855 = vsel %vm1831, %v1822, %v1551
        %v1856 = vsel %vm1831, %v1823, %v1553
        %v1857 = vsel %vm1831, %v1824, %v1555
        %v1858 = vsel %vm1831, %v1825, %v1557
        %v1859 = vsel %vm1831, %v1826, %v1559
        %v1860 = vsel %vm1831, %v1827, %v1561
        %v1861 = vsel %vm1831, %v1828, %v1563
        %v1862 = vsel %vm1831, %v1829, %v1565
        %v1863 = vsel %vm1831, %v1830, %v1567
        %v1864 = vpack.c.bf16 %v1833, %v1832
        %v1865 = vpack.c.bf16 %v1835, %v1834
        %v1866 = vpack.c.bf16 %v1837, %v1836
        %v1867 = vpack.c.bf16 %v1839, %v1838
        %v1868 = vpack.c.bf16 %v1841, %v1840
        %v1869 = vpack.c.bf16 %v1843, %v1842
        %v1870 = vpack.c.bf16 %v1845, %v1844
        %v1871 = vpack.c.bf16 %v1847, %v1846
        %v1872 = vpack.c.bf16 %v1849, %v1848
        %v1873 = vpack.c.bf16 %v1851, %v1850
        %v1874 = vpack.c.bf16 %v1853, %v1852
        %v1875 = vpack.c.bf16 %v1855, %v1854
        %v1876 = vpack.c.bf16 %v1857, %v1856
        %v1877 = vpack.c.bf16 %v1859, %v1858
        %v1878 = vpack.c.bf16 %v1861, %v1860
        %v1879 = vpack.c.bf16 %v1863, %v1862
        %v1880 = vld [vmem:[%s3] sm:$0xf]
        %v1881 = vld [vmem:[%s3 + $0x4] sm:$0xf]
        %v1882 = vld [vmem:[%s3 + $0x8] sm:$0xf]
        %v1883 = vld [vmem:[%s3 + $0xc] sm:$0xf]
        %v1884 = vld [vmem:[%s3 + $0x10] sm:$0x3]
        %v1890 = vunpack.c.l.b16 %v1880
        %v1891 = vunpack.c.l.b16 %v1881
        %v1892 = vunpack.c.l.b16 %v1882
        %v1893 = vunpack.c.l.b16 %v1883
        %v1894 = vunpack.c.l.b16 %v1884
        %v1895 = vpack.c.b16 %v1891, %v1890
        %v1896 = vpack.c.b16 %v1893, %v1892
        %v1897 = vpack.c.b16 %v1894, %v1894
        %vm1900 = vcmask 293888
        %v1902 = vsel %vm1900, %v1864, 0
        %v1905 = vsel %vm1900, %v1865, 0
        %v1908 = vsel %vm1900, %v1866, 0
        %v1911 = vsel %vm1900, %v1867, 0
        %v1914 = vsel %vm1900, %v1868, 0
        %v1917 = vsel %vm1900, %v1869, 0
        %v1920 = vsel %vm1900, %v1870, 0
        %v1923 = vsel %vm1900, %v1871, 0
        %v1926 = vsel %vm1900, %v1872, 0
        %v1929 = vsel %vm1900, %v1873, 0
        %v1932 = vsel %vm1900, %v1874, 0
        %v1935 = vsel %vm1900, %v1875, 0
        %v1938 = vsel %vm1900, %v1876, 0
        %v1941 = vsel %vm1900, %v1877, 0
        %v1944 = vsel %vm1900, %v1878, 0
        %v1947 = vsel %vm1900, %v1879, 0
        %v1950 = vsel %vm1438, %v1897, 0
        %1952 = vmatprep.subr.bf16.mxu0 0
        %1953 = vmatpush1.bf16.msra.mxu0 0
        %1954 = vmatprep.subr.bf16.mxu0 0
        %1955 = vmatpush1.bf16.msra.mxu0 0
        %1956 = vmatprep.subr.bf16.mxu0 0
        %1957 = vmatpush1.bf16.msra.mxu0 0
        %1958 = vmatprep.subr.bf16.mxu0 0
        %1959 = vmatpush1.bf16.msra.mxu0 0
        %1960 = vmatprep.subr.bf16.mxu0 0
        %1961 = vmatpush1.bf16.msra.mxu0 0
        %1962 = vmatprep.subr.bf16.mxu0 0
        %1963 = vmatpush1.bf16.msra.mxu0 %v1950
        %1964 = vmatprep.subr.bf16.mxu0 0
        %1965 = vmatpush1.bf16.msra.mxu0 %v1896
        %1966 = vmatprep.subr.bf16.mxu0 0
        %1967 = vmatpush1.bf16.msra.mxu0 %v1895
        %1968 = vmatprep.subr.bf16.mxu0 0
        %1969 = vmatpush2.bf16.msra.mxu0 0
        %1970 = vmatprep.subr.bf16.mxu0 0
        %1971 = vmatpush2.bf16.msra.mxu0 0
        %1972 = vmatprep.subr.bf16.mxu0 0
        %1973 = vmatpush2.bf16.msra.mxu0 0
        %1974 = vmatprep.subr.bf16.mxu0 0
        %1975 = vmatpush2.bf16.msra.mxu0 0
        %1976 = vmatprep.subr.bf16.mxu0 0
        %1977 = vmatpush2.bf16.msra.mxu0 0
        %1978 = vmatprep.subr.bf16.mxu0 0
        %1979 = vmatpush2.bf16.msra.mxu0 0
        %1980 = vmatprep.subr.bf16.mxu0 0
        %1981 = vmatpush2.bf16.msra.mxu0 0
        %1982 = vmatprep.subr.bf16.mxu0 0
        %1983 = vmatpush2.bf16.msra.mxu0 0
        %1984 = vmatprep.mubr.bf16.mxu0 0
        %1985 = vmatmul.mubr.bf16.gmra.mxu0 %v1902
        %v1986 = vpop.f32.mrf.mxu0
        %v1987 = vadd.f32 0.0, %v1986
        %v1988 = vpop.f32.mrf.mxu0
        %v1989 = vpop.f32.mrf.mxu0
        %v1990 = vadd.f32 0.0, %v1989
        %v1991 = vpop.f32.mrf.mxu0
        %1992 = vmatprep.mubr.bf16.mxu0 0
        %1993 = vmatmul.mubr.bf16.gmra.mxu0 %v1905
        %v1994 = vpop.f32.mrf.mxu0
        %v1995 = vadd.f32 0.0, %v1994
        %v1996 = vpop.f32.mrf.mxu0
        %v1997 = vpop.f32.mrf.mxu0
        %v1998 = vadd.f32 0.0, %v1997
        %v1999 = vpop.f32.mrf.mxu0
        %2000 = vmatprep.mubr.bf16.mxu0 0
        %2001 = vmatmul.mubr.bf16.gmra.mxu0 %v1908
        %v2002 = vpop.f32.mrf.mxu0
        %v2003 = vadd.f32 0.0, %v2002
        %v2004 = vpop.f32.mrf.mxu0
        %v2005 = vpop.f32.mrf.mxu0
        %v2006 = vadd.f32 0.0, %v2005
        %v2007 = vpop.f32.mrf.mxu0
        %2008 = vmatprep.mubr.bf16.mxu0 0
        %2009 = vmatmul.mubr.bf16.gmra.mxu0 %v1911
        %v2010 = vpop.f32.mrf.mxu0
        %v2011 = vadd.f32 0.0, %v2010
        %v2012 = vpop.f32.mrf.mxu0
        %v2013 = vpop.f32.mrf.mxu0
        %v2014 = vadd.f32 0.0, %v2013
        %v2015 = vpop.f32.mrf.mxu0
        %2016 = vmatprep.mubr.bf16.mxu0 0
        %2017 = vmatmul.mubr.bf16.gmra.mxu0 %v1914
        %v2018 = vpop.f32.mrf.mxu0
        %v2019 = vadd.f32 0.0, %v2018
        %v2020 = vpop.f32.mrf.mxu0
        %v2021 = vpop.f32.mrf.mxu0
        %v2022 = vadd.f32 0.0, %v2021
        %v2023 = vpop.f32.mrf.mxu0
        %2024 = vmatprep.mubr.bf16.mxu0 0
        %2025 = vmatmul.mubr.bf16.gmra.mxu0 %v1917
        %v2026 = vpop.f32.mrf.mxu0
        %v2027 = vadd.f32 0.0, %v2026
        %v2028 = vpop.f32.mrf.mxu0
        %v2029 = vpop.f32.mrf.mxu0
        %v2030 = vadd.f32 0.0, %v2029
        %v2031 = vpop.f32.mrf.mxu0
        %2032 = vmatprep.mubr.bf16.mxu0 0
        %2033 = vmatmul.mubr.bf16.gmra.mxu0 %v1920
        %v2034 = vpop.f32.mrf.mxu0
        %v2035 = vadd.f32 0.0, %v2034
        %v2036 = vpop.f32.mrf.mxu0
        %v2037 = vpop.f32.mrf.mxu0
        %v2038 = vadd.f32 0.0, %v2037
        %v2039 = vpop.f32.mrf.mxu0
        %2040 = vmatprep.mubr.bf16.mxu0 0
        %2041 = vmatmul.mubr.bf16.gmra.mxu0 %v1923
        %v2042 = vpop.f32.mrf.mxu0
        %v2043 = vadd.f32 0.0, %v2042
        %v2044 = vpop.f32.mrf.mxu0
        %v2045 = vpop.f32.mrf.mxu0
        %v2046 = vadd.f32 0.0, %v2045
        %v2047 = vpop.f32.mrf.mxu0
        %2048 = vmatprep.mubr.bf16.mxu0 0
        %2049 = vmatmul.mubr.bf16.gmra.mxu0 %v1926
        %v2050 = vpop.f32.mrf.mxu0
        %v2051 = vadd.f32 0.0, %v2050
        %v2052 = vpop.f32.mrf.mxu0
        %v2053 = vpop.f32.mrf.mxu0
        %v2054 = vadd.f32 0.0, %v2053
        %v2055 = vpop.f32.mrf.mxu0
        %2056 = vmatprep.mubr.bf16.mxu0 0
        %2057 = vmatmul.mubr.bf16.gmra.mxu0 %v1929
        %v2058 = vpop.f32.mrf.mxu0
        %v2059 = vadd.f32 0.0, %v2058
        %v2060 = vpop.f32.mrf.mxu0
        %v2061 = vpop.f32.mrf.mxu0
        %v2062 = vadd.f32 0.0, %v2061
        %v2063 = vpop.f32.mrf.mxu0
        %2064 = vmatprep.mubr.bf16.mxu0 0
        %2065 = vmatmul.mubr.bf16.gmra.mxu0 %v1932
        %v2066 = vpop.f32.mrf.mxu0
        %v2067 = vadd.f32 0.0, %v2066
        %v2068 = vpop.f32.mrf.mxu0
        %v2069 = vpop.f32.mrf.mxu0
        %v2070 = vadd.f32 0.0, %v2069
        %v2071 = vpop.f32.mrf.mxu0
        %2072 = vmatprep.mubr.bf16.mxu0 0
        %2073 = vmatmul.mubr.bf16.gmra.mxu0 %v1935
        %v2074 = vpop.f32.mrf.mxu0
        %v2075 = vadd.f32 0.0, %v2074
        %v2076 = vpop.f32.mrf.mxu0
        %v2077 = vpop.f32.mrf.mxu0
        %v2078 = vadd.f32 0.0, %v2077
        %v2079 = vpop.f32.mrf.mxu0
        %2080 = vmatprep.mubr.bf16.mxu0 0
        %2081 = vmatmul.mubr.bf16.gmra.mxu0 %v1938
        %v2082 = vpop.f32.mrf.mxu0
        %v2083 = vadd.f32 0.0, %v2082
        %v2084 = vpop.f32.mrf.mxu0
        %v2085 = vpop.f32.mrf.mxu0
        %v2086 = vadd.f32 0.0, %v2085
        %v2087 = vpop.f32.mrf.mxu0
        %2088 = vmatprep.mubr.bf16.mxu0 0
        %2089 = vmatmul.mubr.bf16.gmra.mxu0 %v1941
        %v2090 = vpop.f32.mrf.mxu0
        %v2091 = vadd.f32 0.0, %v2090
        %v2092 = vpop.f32.mrf.mxu0
        %v2093 = vpop.f32.mrf.mxu0
        %v2094 = vadd.f32 0.0, %v2093
        %v2095 = vpop.f32.mrf.mxu0
        %2096 = vmatprep.mubr.bf16.mxu0 0
        %2097 = vmatmul.mubr.bf16.gmra.mxu0 %v1944
        %v2098 = vpop.f32.mrf.mxu0
        %v2099 = vadd.f32 0.0, %v2098
        %v2100 = vpop.f32.mrf.mxu0
        %v2101 = vpop.f32.mrf.mxu0
        %v2102 = vadd.f32 0.0, %v2101
        %v2103 = vpop.f32.mrf.mxu0
        %2104 = vmatprep.mubr.bf16.mxu0 0
        %2105 = vmatmul.mubr.bf16.gmra.mxu0 %v1947
        %v2106 = vpop.f32.mrf.mxu0
        %v2107 = vadd.f32 0.0, %v2106
        %v2108 = vpop.f32.mrf.mxu0
        %v2109 = vpop.f32.mrf.mxu0
        %v2110 = vadd.f32 0.0, %v2109
        %v2111 = vpop.f32.mrf.mxu0
        %2112 = vdwg.mxu0
        %v2113 = vpack.c.bf16 %v1990, %v1987
        %v2114 = vpack.c.bf16 %v1998, %v1995
        %v2115 = vpack.c.bf16 %v2006, %v2003
        %v2116 = vpack.c.bf16 %v2014, %v2011
        %v2117 = vpack.c.bf16 %v2022, %v2019
        %v2118 = vpack.c.bf16 %v2030, %v2027
        %v2119 = vpack.c.bf16 %v2038, %v2035
        %v2120 = vpack.c.bf16 %v2046, %v2043
        %v2121 = vpack.c.bf16 %v2054, %v2051
        %v2122 = vpack.c.bf16 %v2062, %v2059
        %v2123 = vpack.c.bf16 %v2070, %v2067
        %v2124 = vpack.c.bf16 %v2078, %v2075
        %v2125 = vpack.c.bf16 %v2086, %v2083
        %v2126 = vpack.c.bf16 %v2094, %v2091
        %v2127 = vpack.c.bf16 %v2102, %v2099
        %v2128 = vpack.c.bf16 %v2110, %v2107
        %v2145 = vunpack.c.l.b16 %v2113
        %v2146 = vunpack.c.h.b16 %v2113
        %v2147 = vunpack.c.l.b16 %v2114
        %v2148 = vunpack.c.h.b16 %v2114
        %v2149 = vunpack.c.l.b16 %v2115
        %v2150 = vunpack.c.h.b16 %v2115
        %v2151 = vunpack.c.l.b16 %v2116
        %v2152 = vunpack.c.h.b16 %v2116
        %v2153 = vunpack.c.l.b16 %v2117
        %v2154 = vunpack.c.h.b16 %v2117
        %v2155 = vunpack.c.l.b16 %v2118
        %v2156 = vunpack.c.h.b16 %v2118
        %v2157 = vunpack.c.l.b16 %v2119
        %v2158 = vunpack.c.h.b16 %v2119
        %v2159 = vunpack.c.l.b16 %v2120
        %v2160 = vunpack.c.h.b16 %v2120
        %v2161 = vunpack.c.l.b16 %v2121
        %v2162 = vunpack.c.h.b16 %v2121
        %v2163 = vunpack.c.l.b16 %v2122
        %v2164 = vunpack.c.h.b16 %v2122
        %v2165 = vunpack.c.l.b16 %v2123
        %v2166 = vunpack.c.h.b16 %v2123
        %v2167 = vunpack.c.l.b16 %v2124
        %v2168 = vunpack.c.h.b16 %v2124
        %v2169 = vunpack.c.l.b16 %v2125
        %v2170 = vunpack.c.h.b16 %v2125
        %v2171 = vunpack.c.l.b16 %v2126
        %v2172 = vunpack.c.h.b16 %v2126
        %v2173 = vunpack.c.l.b16 %v2127
        %v2174 = vunpack.c.h.b16 %v2127
        %v2175 = vunpack.c.l.b16 %v2128
        %v2176 = vunpack.c.h.b16 %v2128
        %v2177 = vpack.c.b16 %v2145, %v2145
        %v2178 = vpack.c.b16 %v2146, %v2146
        %v2179 = vpack.c.b16 %v2147, %v2147
        %v2180 = vpack.c.b16 %v2148, %v2148
        %v2181 = vpack.c.b16 %v2149, %v2149
        %v2182 = vpack.c.b16 %v2150, %v2150
        %v2183 = vpack.c.b16 %v2151, %v2151
        %v2184 = vpack.c.b16 %v2152, %v2152
        %v2185 = vpack.c.b16 %v2153, %v2153
        %v2186 = vpack.c.b16 %v2154, %v2154
        %v2187 = vpack.c.b16 %v2155, %v2155
        %v2188 = vpack.c.b16 %v2156, %v2156
        %v2189 = vpack.c.b16 %v2157, %v2157
        %v2190 = vpack.c.b16 %v2158, %v2158
        %v2191 = vpack.c.b16 %v2159, %v2159
        %v2192 = vpack.c.b16 %v2160, %v2160
        %v2193 = vpack.c.b16 %v2161, %v2161
        %v2194 = vpack.c.b16 %v2162, %v2162
        %v2195 = vpack.c.b16 %v2163, %v2163
        %v2196 = vpack.c.b16 %v2164, %v2164
        %v2197 = vpack.c.b16 %v2165, %v2165
        %v2198 = vpack.c.b16 %v2166, %v2166
        %v2199 = vpack.c.b16 %v2167, %v2167
        %v2200 = vpack.c.b16 %v2168, %v2168
        %v2201 = vpack.c.b16 %v2169, %v2169
        %v2202 = vpack.c.b16 %v2170, %v2170
        %v2203 = vpack.c.b16 %v2171, %v2171
        %v2204 = vpack.c.b16 %v2172, %v2172
        %v2205 = vpack.c.b16 %v2173, %v2173
        %v2206 = vpack.c.b16 %v2174, %v2174
        %v2207 = vpack.c.b16 %v2175, %v2175
        %v2208 = vpack.c.b16 %v2176, %v2176
        %vm2241 = vcmask 60416
        %2242 = vst.msk [vmem:[%s314] sm:$0xf] %vm2241, %v2177
        %2243 = vst.msk [vmem:[%s314 + $0x4] sm:$0xf] %vm2241, %v2178
        %2244 = vst.msk [vmem:[%s314 + $0x8] sm:$0xf] %vm2241, %v2179
        %2245 = vst.msk [vmem:[%s314 + $0xc] sm:$0xf] %vm2241, %v2180
        %2246 = vst.msk [vmem:[%s314 + $0x10] sm:$0xf] %vm2241, %v2181
        %2247 = vst.msk [vmem:[%s314 + $0x14] sm:$0xf] %vm2241, %v2182
        %2248 = vst.msk [vmem:[%s314 + $0x18] sm:$0xf] %vm2241, %v2183
        %2249 = vst.msk [vmem:[%s314 + $0x1c] sm:$0xf] %vm2241, %v2184
        %2250 = vst.msk [vmem:[%s314 + $0x20] sm:$0xf] %vm2241, %v2185
        %2251 = vst.msk [vmem:[%s314 + $0x24] sm:$0xf] %vm2241, %v2186
        %2252 = vst.msk [vmem:[%s314 + $0x28] sm:$0xf] %vm2241, %v2187
        %2253 = vst.msk [vmem:[%s314 + $0x2c] sm:$0xf] %vm2241, %v2188
        %2254 = vst.msk [vmem:[%s314 + $0x30] sm:$0xf] %vm2241, %v2189
        %2255 = vst.msk [vmem:[%s314 + $0x34] sm:$0xf] %vm2241, %v2190
        %2256 = vst.msk [vmem:[%s314 + $0x38] sm:$0xf] %vm2241, %v2191
        %2257 = vst.msk [vmem:[%s314 + $0x3c] sm:$0xf] %vm2241, %v2192
        %2258 = vst.msk [vmem:[%s314 + $0x40] sm:$0xf] %vm2241, %v2193
        %2259 = vst.msk [vmem:[%s314 + $0x44] sm:$0xf] %vm2241, %v2194
        %2260 = vst.msk [vmem:[%s314 + $0x48] sm:$0xf] %vm2241, %v2195
        %2261 = vst.msk [vmem:[%s314 + $0x4c] sm:$0xf] %vm2241, %v2196
        %2262 = vst.msk [vmem:[%s314 + $0x50] sm:$0xf] %vm2241, %v2197
        %2263 = vst.msk [vmem:[%s314 + $0x54] sm:$0xf] %vm2241, %v2198
        %2264 = vst.msk [vmem:[%s314 + $0x58] sm:$0xf] %vm2241, %v2199
        %2265 = vst.msk [vmem:[%s314 + $0x5c] sm:$0xf] %vm2241, %v2200
        %2266 = vst.msk [vmem:[%s314 + $0x60] sm:$0xf] %vm2241, %v2201
        %2267 = vst.msk [vmem:[%s314 + $0x64] sm:$0xf] %vm2241, %v2202
        %2268 = vst.msk [vmem:[%s314 + $0x68] sm:$0xf] %vm2241, %v2203
        %2269 = vst.msk [vmem:[%s314 + $0x6c] sm:$0xf] %vm2241, %v2204
        %2270 = vst.msk [vmem:[%s314 + $0x70] sm:$0xf] %vm2241, %v2205
        %2271 = vst.msk [vmem:[%s314 + $0x74] sm:$0xf] %vm2241, %v2206
        %2272 = vst.msk [vmem:[%s314 + $0x78] sm:$0xf] %vm2241, %v2207
        %2273 = vst.msk [vmem:[%s314 + $0x7c] sm:$0xf] %vm2241, %v2208
        %v2274 = vld [vmem:[%s309] sm:$0xff]
        %v2275 = vld [vmem:[%s309 + $0x8] sm:$0xff]
        %2276 = vmatprep.subr.mxu0 0.0
        %2277 = vmatpush1.msra.mxu0 %v2046
        %2278 = vmatprep.subr.mxu0 0.0
        %2279 = vmatpush1.msra.mxu0 %v2043
        %2280 = vmatprep.subr.mxu0 0.0
        %2281 = vmatpush1.msra.mxu0 %v2038
        %2282 = vmatprep.subr.mxu0 0.0
        %2283 = vmatpush1.msra.mxu0 %v2035
        %2284 = vmatprep.subr.mxu0 0.0
        %2285 = vmatpush1.msra.mxu0 %v2030
        %2286 = vmatprep.subr.mxu0 0.0
        %2287 = vmatpush1.msra.mxu0 %v2027
        %2288 = vmatprep.subr.mxu0 0.0
        %2289 = vmatpush1.msra.mxu0 %v2022
        %2290 = vmatprep.subr.mxu0 0.0
        %2291 = vmatpush1.msra.mxu0 %v2019
        %2292 = vmatprep.subr.mxu0 0.0
        %2293 = vmatpush1.msra.mxu0 %v2014
        %2294 = vmatprep.subr.mxu0 0.0
        %2295 = vmatpush1.msra.mxu0 %v2011
        %2296 = vmatprep.subr.mxu0 0.0
        %2297 = vmatpush1.msra.mxu0 %v2006
        %2298 = vmatprep.subr.mxu0 0.0
        %2299 = vmatpush1.msra.mxu0 %v2003
        %2300 = vmatprep.subr.mxu0 0.0
        %2301 = vmatpush1.msra.mxu0 %v1998
        %2302 = vmatprep.subr.mxu0 0.0
        %2303 = vmatpush1.msra.mxu0 %v1995
        %2304 = vmatprep.subr.mxu0 0.0
        %2305 = vmatpush1.msra.mxu0 %v1990
        %2306 = vmatprep.subr.mxu0 0.0
        %2307 = vmatpush1.msra.mxu0 %v1987
        %2308 = vmatprep.subr.mxu0 0.0
        %2309 = vmatpush2.msra.mxu0 %v2110
        %2310 = vmatprep.subr.mxu0 0.0
        %2311 = vmatpush2.msra.mxu0 %v2107
        %2312 = vmatprep.subr.mxu0 0.0
        %2313 = vmatpush2.msra.mxu0 %v2102
        %2314 = vmatprep.subr.mxu0 0.0
        %2315 = vmatpush2.msra.mxu0 %v2099
        %2316 = vmatprep.subr.mxu0 0.0
        %2317 = vmatpush2.msra.mxu0 %v2094
        %2318 = vmatprep.subr.mxu0 0.0
        %2319 = vmatpush2.msra.mxu0 %v2091
        %2320 = vmatprep.subr.mxu0 0.0
        %2321 = vmatpush2.msra.mxu0 %v2086
        %2322 = vmatprep.subr.mxu0 0.0
        %2323 = vmatpush2.msra.mxu0 %v2083
        %2324 = vmatprep.subr.mxu0 0.0
        %2325 = vmatpush2.msra.mxu0 %v2078
        %2326 = vmatprep.subr.mxu0 0.0
        %2327 = vmatpush2.msra.mxu0 %v2075
        %2328 = vmatprep.subr.mxu0 0.0
        %2329 = vmatpush2.msra.mxu0 %v2070
        %2330 = vmatprep.subr.mxu0 0.0
        %2331 = vmatpush2.msra.mxu0 %v2067
        %2332 = vmatprep.subr.mxu0 0.0
        %2333 = vmatpush2.msra.mxu0 %v2062
        %2334 = vmatprep.subr.mxu0 0.0
        %2335 = vmatpush2.msra.mxu0 %v2059
        %2336 = vmatprep.subr.mxu0 0.0
        %2337 = vmatpush2.msra.mxu0 %v2054
        %2338 = vmatprep.subr.mxu0 0.0
        %2339 = vmatpush2.msra.mxu0 %v2051
        %2340 = vmatprep.mubr.f32.mxu0 %v2275
        %2341 = vmatmul.mubr.f32.gmra.mxu0 %v2274
        %v2342 = vpop.f32.mrf.mxu0
        %v2343 = vadd.f32 0.0, %v2342
        %v2344 = vpop.f32.mrf.mxu0
        %2345 = vdwg.mxu0
        %2346 = vst [vmem:[%s286] sm:$0xff] %v2343
        %v2347 = vmul.f32 %v1987, %v1987
        %v2348 = vmul.f32 %v1990, %v1990
        %v2349 = vmul.f32 %v1995, %v1995
        %v2350 = vmul.f32 %v1998, %v1998
        %v2351 = vmul.f32 %v2003, %v2003
        %v2352 = vmul.f32 %v2006, %v2006
        %v2353 = vmul.f32 %v2011, %v2011
        %v2354 = vmul.f32 %v2014, %v2014
        %v2355 = vmul.f32 %v2019, %v2019
        %v2356 = vmul.f32 %v2022, %v2022
        %v2357 = vmul.f32 %v2027, %v2027
        %v2358 = vmul.f32 %v2030, %v2030
        %v2359 = vmul.f32 %v2035, %v2035
        %v2360 = vmul.f32 %v2038, %v2038
        %v2361 = vmul.f32 %v2043, %v2043
        %v2362 = vmul.f32 %v2046, %v2046
        %v2363 = vmul.f32 %v2051, %v2051
        %v2364 = vmul.f32 %v2054, %v2054
        %v2365 = vmul.f32 %v2059, %v2059
        %v2366 = vmul.f32 %v2062, %v2062
        %v2367 = vmul.f32 %v2067, %v2067
        %v2368 = vmul.f32 %v2070, %v2070
        %v2369 = vmul.f32 %v2075, %v2075
        %v2370 = vmul.f32 %v2078, %v2078
        %v2371 = vmul.f32 %v2083, %v2083
        %v2372 = vmul.f32 %v2086, %v2086
        %v2373 = vmul.f32 %v2091, %v2091
        %v2374 = vmul.f32 %v2094, %v2094
        %v2375 = vmul.f32 %v2099, %v2099
        %v2376 = vmul.f32 %v2102, %v2102
        %v2377 = vmul.f32 %v2107, %v2107
        %v2378 = vmul.f32 %v2110, %v2110
        %2379 = vmatprep.subr.mxu0 0.0
        %2380 = vmatpush1.msra.mxu0 %v2362
        %2381 = vmatprep.subr.mxu0 0.0
        %2382 = vmatpush1.msra.mxu0 %v2361
        %2383 = vmatprep.subr.mxu0 0.0
        %2384 = vmatpush1.msra.mxu0 %v2360
        %2385 = vmatprep.subr.mxu0 0.0
        %2386 = vmatpush1.msra.mxu0 %v2359
        %2387 = vmatprep.subr.mxu0 0.0
        %2388 = vmatpush1.msra.mxu0 %v2358
        %2389 = vmatprep.subr.mxu0 0.0
        %2390 = vmatpush1.msra.mxu0 %v2357
        %2391 = vmatprep.subr.mxu0 0.0
        %2392 = vmatpush1.msra.mxu0 %v2356
        %2393 = vmatprep.subr.mxu0 0.0
        %2394 = vmatpush1.msra.mxu0 %v2355
        %2395 = vmatprep.subr.mxu0 0.0
        %2396 = vmatpush1.msra.mxu0 %v2354
        %2397 = vmatprep.subr.mxu0 0.0
        %2398 = vmatpush1.msra.mxu0 %v2353
        %2399 = vmatprep.subr.mxu0 0.0
        %2400 = vmatpush1.msra.mxu0 %v2352
        %2401 = vmatprep.subr.mxu0 0.0
        %2402 = vmatpush1.msra.mxu0 %v2351
        %2403 = vmatprep.subr.mxu0 0.0
        %2404 = vmatpush1.msra.mxu0 %v2350
        %2405 = vmatprep.subr.mxu0 0.0
        %2406 = vmatpush1.msra.mxu0 %v2349
        %2407 = vmatprep.subr.mxu0 0.0
        %2408 = vmatpush1.msra.mxu0 %v2348
        %2409 = vmatprep.subr.mxu0 0.0
        %2410 = vmatpush1.msra.mxu0 %v2347
        %2411 = vmatprep.subr.mxu0 0.0
        %2412 = vmatpush2.msra.mxu0 %v2378
        %2413 = vmatprep.subr.mxu0 0.0
        %2414 = vmatpush2.msra.mxu0 %v2377
        %2415 = vmatprep.subr.mxu0 0.0
        %2416 = vmatpush2.msra.mxu0 %v2376
        %2417 = vmatprep.subr.mxu0 0.0
        %2418 = vmatpush2.msra.mxu0 %v2375
        %2419 = vmatprep.subr.mxu0 0.0
        %2420 = vmatpush2.msra.mxu0 %v2374
        %2421 = vmatprep.subr.mxu0 0.0
        %2422 = vmatpush2.msra.mxu0 %v2373
        %2423 = vmatprep.subr.mxu0 0.0
        %2424 = vmatpush2.msra.mxu0 %v2372
        %2425 = vmatprep.subr.mxu0 0.0
        %2426 = vmatpush2.msra.mxu0 %v2371
        %2427 = vmatprep.subr.mxu0 0.0
        %2428 = vmatpush2.msra.mxu0 %v2370
        %2429 = vmatprep.subr.mxu0 0.0
        %2430 = vmatpush2.msra.mxu0 %v2369
        %2431 = vmatprep.subr.mxu0 0.0
        %2432 = vmatpush2.msra.mxu0 %v2368
        %2433 = vmatprep.subr.mxu0 0.0
        %2434 = vmatpush2.msra.mxu0 %v2367
        %2435 = vmatprep.subr.mxu0 0.0
        %2436 = vmatpush2.msra.mxu0 %v2366
        %2437 = vmatprep.subr.mxu0 0.0
        %2438 = vmatpush2.msra.mxu0 %v2365
        %2439 = vmatprep.subr.mxu0 0.0
        %2440 = vmatpush2.msra.mxu0 %v2364
        %2441 = vmatprep.subr.mxu0 0.0
        %2442 = vmatpush2.msra.mxu0 %v2363
        %2443 = vmatprep.mubr.f32.mxu0 %v2275
        %2444 = vmatmul.mubr.f32.gmra.mxu0 %v2274
        %v2445 = vpop.f32.mrf.mxu0
        %v2446 = vadd.f32 0.0, %v2445
        %v2447 = vpop.f32.mrf.mxu0
        %2448 = vdwg.mxu0
        %2449 = vst [vmem:[%s293] sm:$0xff] %v2446
        %s2450 = smul.u32 32, %s24
        %p2451 = scmp.lt.s32.totalorder %s2450, 127
        %s2452 = scalar_select %p2451, %s2450, 127
        %s2453 = smul.addr %s2452, 4
        %s2454 = scalar_lea.vmem %s4, %s2453
        %s2455 = sand.u32 %s157, 1
        %s2456 = scalar_lea.sflag [#allocation3], %s2455
        %s2457 = sand.u32 %s157, 1
        %s2458 = smul.addr %s2457, 8
        %s2459 = scalar_lea.vmem [#allocation2], %s2458
        %s2460 = sand.u32 %s183, 1
        %s2461 = scalar_lea.sflag [#allocation5], %s2460
        %s2462 = sand.u32 %s183, 1
        %s2463 = smul.addr %s2462, 8
        %s2464 = scalar_lea.vmem [#allocation4], %s2463
        // Predicated region
        $region37: #{tpu_custom_call.1} parent=35 // pred_check
          %p2465 = pneg %p141
        $region38: #{tpu_custom_call.1} parent=35 // pred_check_branch
          %2467 = sbr.rel (%p2465) target = $region40
        $region39: #{tpu_custom_call.1} parent=35 // pred_region
          %s2468 = smul.u32 32, %s24
        $region40: #{tpu_custom_call.1} parent=35 // pred_fallthru
          _
        // Predicated region
        $region41: #{tpu_custom_call.1} parent=35 // pred_check
          %p2469 = pneg %p167
        $region42: #{tpu_custom_call.1} parent=35 // pred_check_branch
          %2471 = sbr.rel (%p2469) target = $region44
        $region43: #{tpu_custom_call.1} parent=35 // pred_region
          %s2473 = ssub.s32 128, 128
          %2474 = vsyncadd %s2456, %s2473
          %s2475 = smul.addr %s24, 128
          %s2476 = scalar_lea.hbm %s5, %s2475
          %s2478 = sshll.u32 %s2459, 4
          %s2479 = int_to_ptr.vmem [resolvable:$true] %s2478
          %2481 = dma.vmem_to_hbm [thread:$0]  %s2479, 128, %s2476, %s2456
        $region44: #{tpu_custom_call.1} parent=35 // pred_fallthru
          _
        // Predicated region
        $region45: #{tpu_custom_call.1} parent=35 // pred_check
          %p2482 = pneg %p193
        $region46: #{tpu_custom_call.1} parent=35 // pred_check_branch
          %2484 = sbr.rel (%p2482) target = $region48
        $region47: #{tpu_custom_call.1} parent=35 // pred_region
          %s2486 = ssub.s32 128, 128
          %2487 = vsyncadd %s2461, %s2486
          %s2488 = smul.addr %s24, 128
          %s2489 = scalar_lea.hbm %s6, %s2488
          %s2491 = sshll.u32 %s2464, 4
          %s2492 = int_to_ptr.vmem [resolvable:$true] %s2491
          %2494 = dma.vmem_to_hbm [thread:$0]  %s2492, 128, %s2489, %s2461
        $region48: #{tpu_custom_call.1} parent=35 // pred_fallthru
          _
      $region36: #{tpu_custom_call.1} parent=5 // pred_fallthru
        _
      %p2495 = scmp.le.s32.totalorder 2, %s19
      // Predicated region
      $region49: #{tpu_custom_call.1} parent=5 // pred_check
        %p2496 = pneg %p2495
      $region50: #{tpu_custom_call.1} parent=5 // pred_check_branch
        %2498 = sbr.rel (%p2496) target = $region52
      $region51: #{tpu_custom_call.1} parent=5 // pred_region
        %s2499 = ssub.s32 %s19, 2
        // Predicated region
        $region53: #{tpu_custom_call.1} parent=51 // pred_check
          %p2500 = pneg %p147
        $region54: #{tpu_custom_call.1} parent=51 // pred_check_branch
          %2502 = sbr.rel (%p2500) target = $region56
        $region55: #{tpu_custom_call.1} parent=51 // pred_region
          %s2503 = smul.u32 32, %s25
          %p2504 = scmp.lt.s32.totalorder %s2503, 127
          %s2505 = scalar_select %p2504, %s2503, 127
          %s2506 = smul.addr %s2505, 4
          %s2507 = scalar_lea.vmem %s4, %s2506
        $region56: #{tpu_custom_call.1} parent=51 // pred_fallthru
          _
        // Predicated region
        $region57: #{tpu_custom_call.1} parent=51 // pred_check
          %p2508 = pneg %p173
        $region58: #{tpu_custom_call.1} parent=51 // pred_check_branch
          %2510 = sbr.rel (%p2508) target = $region60
        $region59: #{tpu_custom_call.1} parent=51 // pred_region
          %s2511 = sand.u32 %s158, 1
          %s2512 = scalar_lea.sflag [#allocation3], %s2511
          %s2513 = sand.u32 %s158, 1
          %s2514 = smul.addr %s2513, 8
          %s2515 = scalar_lea.vmem [#allocation2], %s2514
          %2516 = dma.done %s2512, 128
        $region60: #{tpu_custom_call.1} parent=51 // pred_fallthru
          _
        // Predicated region
        $region61: #{tpu_custom_call.1} parent=51 // pred_check
          %p2517 = pneg %p199
        $region62: #{tpu_custom_call.1} parent=51 // pred_check_branch
          %2519 = sbr.rel (%p2517) target = $region64
        $region63: #{tpu_custom_call.1} parent=51 // pred_region
          %s2520 = sand.u32 %s184, 1
          %s2521 = scalar_lea.sflag [#allocation5], %s2520
          %s2522 = sand.u32 %s184, 1
          %s2523 = smul.addr %s2522, 8
          %s2524 = scalar_lea.vmem [#allocation4], %s2523
          %2525 = dma.done %s2521, 128
        $region64: #{tpu_custom_call.1} parent=51 // pred_fallthru
          _
      $region52: #{tpu_custom_call.1} parent=5 // pred_fallthru
        _
    $region6: #{tpu_custom_call.1} parent=1 // loop_footer
      %s23 = sadd.s32 1, %s19
    $region7: #{tpu_custom_call.1} parent=1 // loop_footer_branch
      %18 = sbr.rel target = $region3
    $region8: #{tpu_custom_call.1} parent=1 // loop_exit
      _
    %2526 = vsyncpa [#allocation3], 1
    %s2527 = scalar_lea.sflag [#allocation3], 1
    %2528 = vsyncpa %s2527, 1
    %2529 = vsyncpa [#allocation5], 1
    %s2530 = scalar_lea.sflag [#allocation5], 1
    %2531 = vsyncpa %s2530, 1

</llo_original>
